<compile_context>
chip_gen: v6e
topology: v6e:2x2x1
jax: 0.10.0
libtpu: 0.0.40
codegen_flags: <defaults>
</compile_context>

<pallas_src>
import jax
import jax.numpy as jnp
from jax import lax
from jax.experimental import pallas as pl
from jax.experimental.pallas import tpu as pltpu


def generator_kernel(scalars_ref,                    # SMEM: [mean, std, 1/std]
                     cond_ref, noise_ref,            # (seq, B), (N, B)
                     wi_ref, bi_ref, wh_ref, bh_ref, # GRU (stacked gates r,z,n)
                     w1_ref, b1_ref, w2_ref, b2_ref, # MLP
                     out_ref):                       # (1, B)
    seq, batch = cond_ref.shape
    hid = wh_ref.shape[1]

    mean = scalars_ref[0]
    std = scalars_ref[1]
    inv_std = scalars_ref[2]

    wi = wi_ref[...]                                  # (3H, 1)
    bi = bi_ref[...]                                  # (3H, 1)
    wh = wh_ref[...]                                  # (3H, H)
    bh = bh_ref[...]                                  # (3H, 1)

    # Hoisted out of the recurrence: normalize every timestep once.
    cond_n = (cond_ref[...] - mean) * inv_std         # (seq, B)

    h = jnp.zeros((hid, batch), jnp.float32)
    # Fully unrolled recurrence (seq is small & static). The h-independent
    # input-gate preactivations `gi` sit off the serial dependency chain, so
    # the scheduler can overlap them with the recurrent matmul.
    for t in range(seq):
        x_t = cond_n[t:t + 1, :]                      # (1, B) static slice
        gi = wi * x_t + bi                            # (3H, B) h-independent
        gh = jnp.dot(wh, h, preferred_element_type=jnp.float32) + bh  # (3H, B)
        r = jax.nn.sigmoid(gi[:hid] + gh[:hid])
        z = jax.nn.sigmoid(gi[hid:2 * hid] + gh[hid:2 * hid])
        n = jnp.tanh(gi[2 * hid:] + r * gh[2 * hid:])
        h = (1.0 - z) * n + z * h                     # (H, B)

    # MLP on g = [h; noise]: one (D, D) x (D, B) dot, ReLU, then (1, D) dot.
    g = jnp.concatenate([h, noise_ref[...]], axis=0)  # (H+N, B)
    g1 = jnp.dot(w1_ref[...], g, preferred_element_type=jnp.float32) + b1_ref[...]
    g1 = jnp.maximum(g1, 0.0)
    out = jnp.dot(w2_ref[...], g1, preferred_element_type=jnp.float32) + b2_ref[...]
    out_ref[...] = out * std + mean                   # (1, B), unmasked store


def generator_forward(params, noise, condition, mean=0.0, std=1.0):
    """noise: (batch, noise_size), condition: (batch, condition_size) -> (batch, 1)."""
    noise = jnp.asarray(noise, jnp.float32)
    condition = jnp.asarray(condition, jnp.float32)
    batch = noise.shape[0]

    # Lane-dense layout: batch in lanes, padded to a multiple of 128.
    # (For very large batches, tile this dim with a "parallel" grid axis so
    #  v7x's second TensorCore takes half the lanes; not needed at this scale.)
    bp = max(128, -(-batch // 128) * 128)
    cond_t = jnp.pad(condition.T, ((0, 0), (0, bp - batch)))   # (seq, bp)
    noise_t = jnp.pad(noise.T, ((0, 0), (0, bp - batch)))      # (N, bp)

    std_f = jnp.float32(std)
    scalars = jnp.stack([jnp.float32(mean), std_f, 1.0 / std_f])  # SMEM scalars

    smem = pl.BlockSpec(memory_space=pltpu.MemorySpace.SMEM)
    vmem = pl.BlockSpec(memory_space=pltpu.MemorySpace.VMEM)

    out_p = pl.pallas_call(
        generator_kernel,
        in_specs=[smem] + [vmem] * 10,
        out_specs=vmem,
        out_shape=jax.ShapeDtypeStruct((1, bp), jnp.float32),
    )(scalars, cond_t, noise_t,
      params["w_i"], params["b_i"], params["w_h"], params["b_h"],
      params["w1"], params["b1"], params["w2"], params["b2"])

    return out_p[:, :batch].T                          # (batch, 1)


def init_params(key, noise_size, hidden):
    """Deterministic init mirroring PyTorch default uniform(-1/sqrt(fan), 1/sqrt(fan)).

    GRU weights are kept in PyTorch's native stacked layout (3H, ...) with gate
    order r, z, n; the MLP first Linear is the full (D, D) matrix whose first H
    columns act on h and last N columns act on noise.
    """
    ks = jax.random.split(key, 8)
    u = lambda k, shape, b: jax.random.uniform(k, shape, jnp.float32, -b, b)
    gb = 1.0 / float(hidden) ** 0.5
    d = hidden + noise_size
    lb = 1.0 / float(d) ** 0.5
    return {
        "w_i": u(ks[0], (3 * hidden, 1), gb),
        "w_h": u(ks[1], (3 * hidden, hidden), gb),
        "b_i": u(ks[2], (3 * hidden, 1), gb),
        "b_h": u(ks[3], (3 * hidden, 1), gb),
        "w1":  u(ks[4], (d, d), lb),
        "b1":  u(ks[5], (d, 1), lb),
        "w2":  u(ks[6], (1, d), lb),
        "b2":  u(ks[7], (1, 1), lb),
    }


def generator_reference(params, noise, condition, mean=0.0, std=1.0):
    """Pure-JAX reference (same math as the PyTorch module)."""
    cond_t = jnp.asarray(condition, jnp.float32).T     # (seq, batch)
    noise_t = jnp.asarray(noise, jnp.float32).T        # (N, batch)
    seq, batch = cond_t.shape
    hid = params["w_h"].shape[1]
    w_i, b_i = params["w_i"], params["b_i"]
    w_h, b_h = params["w_h"], params["b_h"]

    def step(t, h):
        x_t = (lax.dynamic_slice_in_dim(cond_t, t, 1, axis=0) - mean) / std
        gi = w_i * x_t + b_i                           # (3H, batch)
        gh = w_h @ h + b_h                             # (3H, batch)
        r = jax.nn.sigmoid(gi[:hid] + gh[:hid])
        z = jax.nn.sigmoid(gi[hid:2 * hid] + gh[hid:2 * hid])
        n = jnp.tanh(gi[2 * hid:] + r * gh[2 * hid:])
        return (1.0 - z) * n + z * h

    h = lax.fori_loop(0, seq, step, jnp.zeros((hid, batch), jnp.float32))
    g = jnp.concatenate([h, noise_t], axis=0)
    g1 = jnp.maximum(params["w1"] @ g + params["b1"], 0.0)
    out = params["w2"] @ g1 + params["b2"]
    return (out * std + mean).T


if __name__ == "__main__":
    noise_size = 32
    condition_size = 8
    generator_latent_size = 32
    batch = 4
    mean, std = 0.5, 2.0

    key = jax.random.PRNGKey(0)
    k_param, k_noise, k_cond = jax.random.split(key, 3)

    params = init_params(k_param, noise_size, generator_latent_size)
    noise = jax.random.normal(k_noise, (batch, noise_size), jnp.float32)
    condition = jax.random.normal(k_cond, (batch, condition_size), jnp.float32)

    out = generator_forward(params, noise, condition, mean=mean, std=std)
    out = jax.block_until_ready(out)

    ref = generator_reference(params, noise, condition, mean=mean, std=std)
    assert out.shape == (batch, 1), out.shape
    assert bool(jnp.allclose(out, ref, rtol=1e-4, atol=1e-4)), (out, ref)

    print("KERNEL_OK")
</pallas_src>

<mosaic_0001>
module attributes {stable_mosaic.version = 11 : i64} {
  func.func @generator_kernel(%arg0: memref<3xf32, #tpu.memory_space<smem>>, %arg1: memref<8x128xf32, #tpu.memory_space<vmem>>, %arg2: memref<32x128xf32, #tpu.memory_space<vmem>>, %arg3: memref<96x1xf32, #tpu.memory_space<vmem>>, %arg4: memref<96x1xf32, #tpu.memory_space<vmem>>, %arg5: memref<96x32xf32, #tpu.memory_space<vmem>>, %arg6: memref<96x1xf32, #tpu.memory_space<vmem>>, %arg7: memref<64x64xf32, #tpu.memory_space<vmem>>, %arg8: memref<64x1xf32, #tpu.memory_space<vmem>>, %arg9: memref<1x64xf32, #tpu.memory_space<vmem>>, %arg10: memref<1x1xf32, #tpu.memory_space<vmem>>, %arg11: memref<1x128xf32, #tpu.memory_space<vmem>>) attributes {dimension_semantics = [], scalar_prefetch = 0 : i64, scratch_operands = 0 : i64, tpu.core_type = #tpu.core_type<tc>} {
    %c0 = arith.constant 0 : index
    %0 = memref.load %arg0[%c0] : memref<3xf32, #tpu.memory_space<smem>>
    %c1 = arith.constant 1 : index
    %1 = memref.load %arg0[%c1] : memref<3xf32, #tpu.memory_space<smem>>
    %c2 = arith.constant 2 : index
    %2 = memref.load %arg0[%c2] : memref<3xf32, #tpu.memory_space<smem>>
    %c0_0 = arith.constant 0 : index
    %c0_1 = arith.constant 0 : index
    %3 = vector.load %arg3[%c0_0, %c0_1] : memref<96x1xf32, #tpu.memory_space<vmem>>, vector<96x1xf32>
    %c0_2 = arith.constant 0 : index
    %c0_3 = arith.constant 0 : index
    %4 = vector.load %arg4[%c0_2, %c0_3] : memref<96x1xf32, #tpu.memory_space<vmem>>, vector<96x1xf32>
    %c0_4 = arith.constant 0 : index
    %c0_5 = arith.constant 0 : index
    %5 = vector.load %arg5[%c0_4, %c0_5] : memref<96x32xf32, #tpu.memory_space<vmem>>, vector<96x32xf32>
    %c0_6 = arith.constant 0 : index
    %c0_7 = arith.constant 0 : index
    %6 = vector.load %arg6[%c0_6, %c0_7] : memref<96x1xf32, #tpu.memory_space<vmem>>, vector<96x1xf32>
    %c0_8 = arith.constant 0 : index
    %c0_9 = arith.constant 0 : index
    %7 = vector.load %arg1[%c0_8, %c0_9] : memref<8x128xf32, #tpu.memory_space<vmem>>, vector<8x128xf32>
    %8 = vector.broadcast %0 : f32 to vector<8x128xf32>
    %9 = arith.subf %7, %8 : vector<8x128xf32>
    %10 = vector.broadcast %2 : f32 to vector<8x128xf32>
    %11 = arith.mulf %9, %10 : vector<8x128xf32>
    %cst = arith.constant 0.000000e+00 : f32
    %12 = vector.broadcast %cst : f32 to vector<32x128xf32>
    %13 = vector.extract_strided_slice %11 {offsets = [0, 0], sizes = [1, 128], strides = [1, 1]} : vector<8x128xf32> to vector<1x128xf32>
    %14 = vector.broadcast %3 : vector<96x1xf32> to vector<96x128xf32>
    %15 = vector.broadcast %13 : vector<1x128xf32> to vector<96x128xf32>
    %16 = arith.mulf %14, %15 : vector<96x128xf32>
    %17 = vector.broadcast %4 : vector<96x1xf32> to vector<96x128xf32>
    %18 = arith.addf %16, %17 : vector<96x128xf32>
    %cst_10 = arith.constant dense<0.000000e+00> : vector<96x128xf32>
    %19 = tpu.matmul %5, %12, %cst_10 {dimension_numbers = #tpu.dot_dimension_numbers<[1], [0], [0], [1], [0, 0, 1, 1], [], []>} : vector<96x32xf32>, vector<32x128xf32>, vector<96x128xf32> -> vector<96x128xf32>
    %20 = vector.broadcast %6 : vector<96x1xf32> to vector<96x128xf32>
    %21 = arith.addf %19, %20 : vector<96x128xf32>
    %22 = vector.extract_strided_slice %18 {offsets = [0, 0], sizes = [32, 128], strides = [1, 1]} : vector<96x128xf32> to vector<32x128xf32>
    %23 = vector.extract_strided_slice %21 {offsets = [0, 0], sizes = [32, 128], strides = [1, 1]} : vector<96x128xf32> to vector<32x128xf32>
    %24 = arith.addf %22, %23 : vector<32x128xf32>
    %25 = arith.negf %24 : vector<32x128xf32>
    %26 = math.exp %25 : vector<32x128xf32>
    %cst_11 = arith.constant 1.000000e+00 : f32
    %27 = vector.broadcast %cst_11 : f32 to vector<32x128xf32>
    %28 = arith.addf %27, %26 : vector<32x128xf32>
    %29 = arith.divf %27, %28 : vector<32x128xf32>
    %30 = vector.extract_strided_slice %18 {offsets = [32, 0], sizes = [32, 128], strides = [1, 1]} : vector<96x128xf32> to vector<32x128xf32>
    %31 = vector.extract_strided_slice %21 {offsets = [32, 0], sizes = [32, 128], strides = [1, 1]} : vector<96x128xf32> to vector<32x128xf32>
    %32 = arith.addf %30, %31 : vector<32x128xf32>
    %33 = arith.negf %32 : vector<32x128xf32>
    %34 = math.exp %33 : vector<32x128xf32>
    %cst_12 = arith.constant 1.000000e+00 : f32
    %35 = vector.broadcast %cst_12 : f32 to vector<32x128xf32>
    %36 = arith.addf %35, %34 : vector<32x128xf32>
    %37 = arith.divf %35, %36 : vector<32x128xf32>
    %38 = vector.extract_strided_slice %18 {offsets = [64, 0], sizes = [32, 128], strides = [1, 1]} : vector<96x128xf32> to vector<32x128xf32>
    %39 = vector.extract_strided_slice %21 {offsets = [64, 0], sizes = [32, 128], strides = [1, 1]} : vector<96x128xf32> to vector<32x128xf32>
    %40 = arith.mulf %29, %39 : vector<32x128xf32>
    %41 = arith.addf %38, %40 : vector<32x128xf32>
    %42 = math.tanh %41 : vector<32x128xf32>
    %cst_13 = arith.constant 1.000000e+00 : f32
    %43 = vector.broadcast %cst_13 : f32 to vector<32x128xf32>
    %44 = arith.subf %43, %37 : vector<32x128xf32>
    %45 = arith.mulf %44, %42 : vector<32x128xf32>
    %46 = arith.mulf %37, %12 : vector<32x128xf32>
    %47 = arith.addf %45, %46 : vector<32x128xf32>
    %48 = vector.extract_strided_slice %11 {offsets = [1, 0], sizes = [1, 128], strides = [1, 1]} : vector<8x128xf32> to vector<1x128xf32>
    %49 = vector.broadcast %3 : vector<96x1xf32> to vector<96x128xf32>
    %50 = vector.broadcast %48 : vector<1x128xf32> to vector<96x128xf32>
    %51 = arith.mulf %49, %50 : vector<96x128xf32>
    %52 = vector.broadcast %4 : vector<96x1xf32> to vector<96x128xf32>
    %53 = arith.addf %51, %52 : vector<96x128xf32>
    %cst_14 = arith.constant dense<0.000000e+00> : vector<96x128xf32>
    %54 = tpu.matmul %5, %47, %cst_14 {dimension_numbers = #tpu.dot_dimension_numbers<[1], [0], [0], [1], [0, 0, 1, 1], [], []>} : vector<96x32xf32>, vector<32x128xf32>, vector<96x128xf32> -> vector<96x128xf32>
    %55 = vector.broadcast %6 : vector<96x1xf32> to vector<96x128xf32>
    %56 = arith.addf %54, %55 : vector<96x128xf32>
    %57 = vector.extract_strided_slice %53 {offsets = [0, 0], sizes = [32, 128], strides = [1, 1]} : vector<96x128xf32> to vector<32x128xf32>
    %58 = vector.extract_strided_slice %56 {offsets = [0, 0], sizes = [32, 128], strides = [1, 1]} : vector<96x128xf32> to vector<32x128xf32>
    %59 = arith.addf %57, %58 : vector<32x128xf32>
    %60 = arith.negf %59 : vector<32x128xf32>
    %61 = math.exp %60 : vector<32x128xf32>
    %cst_15 = arith.constant 1.000000e+00 : f32
    %62 = vector.broadcast %cst_15 : f32 to vector<32x128xf32>
    %63 = arith.addf %62, %61 : vector<32x128xf32>
    %64 = arith.divf %62, %63 : vector<32x128xf32>
    %65 = vector.extract_strided_slice %53 {offsets = [32, 0], sizes = [32, 128], strides = [1, 1]} : vector<96x128xf32> to vector<32x128xf32>
    %66 = vector.extract_strided_slice %56 {offsets = [32, 0], sizes = [32, 128], strides = [1, 1]} : vector<96x128xf32> to vector<32x128xf32>
    %67 = arith.addf %65, %66 : vector<32x128xf32>
    %68 = arith.negf %67 : vector<32x128xf32>
    %69 = math.exp %68 : vector<32x128xf32>
    %cst_16 = arith.constant 1.000000e+00 : f32
    %70 = vector.broadcast %cst_16 : f32 to vector<32x128xf32>
    %71 = arith.addf %70, %69 : vector<32x128xf32>
    %72 = arith.divf %70, %71 : vector<32x128xf32>
    %73 = vector.extract_strided_slice %53 {offsets = [64, 0], sizes = [32, 128], strides = [1, 1]} : vector<96x128xf32> to vector<32x128xf32>
    %74 = vector.extract_strided_slice %56 {offsets = [64, 0], sizes = [32, 128], strides = [1, 1]} : vector<96x128xf32> to vector<32x128xf32>
    %75 = arith.mulf %64, %74 : vector<32x128xf32>
    %76 = arith.addf %73, %75 : vector<32x128xf32>
    %77 = math.tanh %76 : vector<32x128xf32>
    %cst_17 = arith.constant 1.000000e+00 : f32
    %78 = vector.broadcast %cst_17 : f32 to vector<32x128xf32>
    %79 = arith.subf %78, %72 : vector<32x128xf32>
    %80 = arith.mulf %79, %77 : vector<32x128xf32>
    %81 = arith.mulf %72, %47 : vector<32x128xf32>
    %82 = arith.addf %80, %81 : vector<32x128xf32>
    %83 = vector.extract_strided_slice %11 {offsets = [2, 0], sizes = [1, 128], strides = [1, 1]} : vector<8x128xf32> to vector<1x128xf32>
    %84 = vector.broadcast %3 : vector<96x1xf32> to vector<96x128xf32>
    %85 = vector.broadcast %83 : vector<1x128xf32> to vector<96x128xf32>
    %86 = arith.mulf %84, %85 : vector<96x128xf32>
    %87 = vector.broadcast %4 : vector<96x1xf32> to vector<96x128xf32>
    %88 = arith.addf %86, %87 : vector<96x128xf32>
    %cst_18 = arith.constant dense<0.000000e+00> : vector<96x128xf32>
    %89 = tpu.matmul %5, %82, %cst_18 {dimension_numbers = #tpu.dot_dimension_numbers<[1], [0], [0], [1], [0, 0, 1, 1], [], []>} : vector<96x32xf32>, vector<32x128xf32>, vector<96x128xf32> -> vector<96x128xf32>
    %90 = vector.broadcast %6 : vector<96x1xf32> to vector<96x128xf32>
    %91 = arith.addf %89, %90 : vector<96x128xf32>
    %92 = vector.extract_strided_slice %88 {offsets = [0, 0], sizes = [32, 128], strides = [1, 1]} : vector<96x128xf32> to vector<32x128xf32>
    %93 = vector.extract_strided_slice %91 {offsets = [0, 0], sizes = [32, 128], strides = [1, 1]} : vector<96x128xf32> to vector<32x128xf32>
    %94 = arith.addf %92, %93 : vector<32x128xf32>
    %95 = arith.negf %94 : vector<32x128xf32>
    %96 = math.exp %95 : vector<32x128xf32>
    %cst_19 = arith.constant 1.000000e+00 : f32
    %97 = vector.broadcast %cst_19 : f32 to vector<32x128xf32>
    %98 = arith.addf %97, %96 : vector<32x128xf32>
    %99 = arith.divf %97, %98 : vector<32x128xf32>
    %100 = vector.extract_strided_slice %88 {offsets = [32, 0], sizes = [32, 128], strides = [1, 1]} : vector<96x128xf32> to vector<32x128xf32>
    %101 = vector.extract_strided_slice %91 {offsets = [32, 0], sizes = [32, 128], strides = [1, 1]} : vector<96x128xf32> to vector<32x128xf32>
    %102 = arith.addf %100, %101 : vector<32x128xf32>
    %103 = arith.negf %102 : vector<32x128xf32>
    %104 = math.exp %103 : vector<32x128xf32>
    %cst_20 = arith.constant 1.000000e+00 : f32
    %105 = vector.broadcast %cst_20 : f32 to vector<32x128xf32>
    %106 = arith.addf %105, %104 : vector<32x128xf32>
    %107 = arith.divf %105, %106 : vector<32x128xf32>
    %108 = vector.extract_strided_slice %88 {offsets = [64, 0], sizes = [32, 128], strides = [1, 1]} : vector<96x128xf32> to vector<32x128xf32>
    %109 = vector.extract_strided_slice %91 {offsets = [64, 0], sizes = [32, 128], strides = [1, 1]} : vector<96x128xf32> to vector<32x128xf32>
    %110 = arith.mulf %99, %109 : vector<32x128xf32>
    %111 = arith.addf %108, %110 : vector<32x128xf32>
    %112 = math.tanh %111 : vector<32x128xf32>
    %cst_21 = arith.constant 1.000000e+00 : f32
    %113 = vector.broadcast %cst_21 : f32 to vector<32x128xf32>
    %114 = arith.subf %113, %107 : vector<32x128xf32>
    %115 = arith.mulf %114, %112 : vector<32x128xf32>
    %116 = arith.mulf %107, %82 : vector<32x128xf32>
    %117 = arith.addf %115, %116 : vector<32x128xf32>
    %118 = vector.extract_strided_slice %11 {offsets = [3, 0], sizes = [1, 128], strides = [1, 1]} : vector<8x128xf32> to vector<1x128xf32>
    %119 = vector.broadcast %3 : vector<96x1xf32> to vector<96x128xf32>
    %120 = vector.broadcast %118 : vector<1x128xf32> to vector<96x128xf32>
    %121 = arith.mulf %119, %120 : vector<96x128xf32>
    %122 = vector.broadcast %4 : vector<96x1xf32> to vector<96x128xf32>
    %123 = arith.addf %121, %122 : vector<96x128xf32>
    %cst_22 = arith.constant dense<0.000000e+00> : vector<96x128xf32>
    %124 = tpu.matmul %5, %117, %cst_22 {dimension_numbers = #tpu.dot_dimension_numbers<[1], [0], [0], [1], [0, 0, 1, 1], [], []>} : vector<96x32xf32>, vector<32x128xf32>, vector<96x128xf32> -> vector<96x128xf32>
    %125 = vector.broadcast %6 : vector<96x1xf32> to vector<96x128xf32>
    %126 = arith.addf %124, %125 : vector<96x128xf32>
    %127 = vector.extract_strided_slice %123 {offsets = [0, 0], sizes = [32, 128], strides = [1, 1]} : vector<96x128xf32> to vector<32x128xf32>
    %128 = vector.extract_strided_slice %126 {offsets = [0, 0], sizes = [32, 128], strides = [1, 1]} : vector<96x128xf32> to vector<32x128xf32>
    %129 = arith.addf %127, %128 : vector<32x128xf32>
    %130 = arith.negf %129 : vector<32x128xf32>
    %131 = math.exp %130 : vector<32x128xf32>
    %cst_23 = arith.constant 1.000000e+00 : f32
    %132 = vector.broadcast %cst_23 : f32 to vector<32x128xf32>
    %133 = arith.addf %132, %131 : vector<32x128xf32>
    %134 = arith.divf %132, %133 : vector<32x128xf32>
    %135 = vector.extract_strided_slice %123 {offsets = [32, 0], sizes = [32, 128], strides = [1, 1]} : vector<96x128xf32> to vector<32x128xf32>
    %136 = vector.extract_strided_slice %126 {offsets = [32, 0], sizes = [32, 128], strides = [1, 1]} : vector<96x128xf32> to vector<32x128xf32>
    %137 = arith.addf %135, %136 : vector<32x128xf32>
    %138 = arith.negf %137 : vector<32x128xf32>
    %139 = math.exp %138 : vector<32x128xf32>
    %cst_24 = arith.constant 1.000000e+00 : f32
    %140 = vector.broadcast %cst_24 : f32 to vector<32x128xf32>
    %141 = arith.addf %140, %139 : vector<32x128xf32>
    %142 = arith.divf %140, %141 : vector<32x128xf32>
    %143 = vector.extract_strided_slice %123 {offsets = [64, 0], sizes = [32, 128], strides = [1, 1]} : vector<96x128xf32> to vector<32x128xf32>
    %144 = vector.extract_strided_slice %126 {offsets = [64, 0], sizes = [32, 128], strides = [1, 1]} : vector<96x128xf32> to vector<32x128xf32>
    %145 = arith.mulf %134, %144 : vector<32x128xf32>
    %146 = arith.addf %143, %145 : vector<32x128xf32>
    %147 = math.tanh %146 : vector<32x128xf32>
    %cst_25 = arith.constant 1.000000e+00 : f32
    %148 = vector.broadcast %cst_25 : f32 to vector<32x128xf32>
    %149 = arith.subf %148, %142 : vector<32x128xf32>
    %150 = arith.mulf %149, %147 : vector<32x128xf32>
    %151 = arith.mulf %142, %117 : vector<32x128xf32>
    %152 = arith.addf %150, %151 : vector<32x128xf32>
    %153 = vector.extract_strided_slice %11 {offsets = [4, 0], sizes = [1, 128], strides = [1, 1]} : vector<8x128xf32> to vector<1x128xf32>
    %154 = vector.broadcast %3 : vector<96x1xf32> to vector<96x128xf32>
    %155 = vector.broadcast %153 : vector<1x128xf32> to vector<96x128xf32>
    %156 = arith.mulf %154, %155 : vector<96x128xf32>
    %157 = vector.broadcast %4 : vector<96x1xf32> to vector<96x128xf32>
    %158 = arith.addf %156, %157 : vector<96x128xf32>
    %cst_26 = arith.constant dense<0.000000e+00> : vector<96x128xf32>
    %159 = tpu.matmul %5, %152, %cst_26 {dimension_numbers = #tpu.dot_dimension_numbers<[1], [0], [0], [1], [0, 0, 1, 1], [], []>} : vector<96x32xf32>, vector<32x128xf32>, vector<96x128xf32> -> vector<96x128xf32>
    %160 = vector.broadcast %6 : vector<96x1xf32> to vector<96x128xf32>
    %161 = arith.addf %159, %160 : vector<96x128xf32>
    %162 = vector.extract_strided_slice %158 {offsets = [0, 0], sizes = [32, 128], strides = [1, 1]} : vector<96x128xf32> to vector<32x128xf32>
    %163 = vector.extract_strided_slice %161 {offsets = [0, 0], sizes = [32, 128], strides = [1, 1]} : vector<96x128xf32> to vector<32x128xf32>
    %164 = arith.addf %162, %163 : vector<32x128xf32>
    %165 = arith.negf %164 : vector<32x128xf32>
    %166 = math.exp %165 : vector<32x128xf32>
    %cst_27 = arith.constant 1.000000e+00 : f32
    %167 = vector.broadcast %cst_27 : f32 to vector<32x128xf32>
    %168 = arith.addf %167, %166 : vector<32x128xf32>
    %169 = arith.divf %167, %168 : vector<32x128xf32>
    %170 = vector.extract_strided_slice %158 {offsets = [32, 0], sizes = [32, 128], strides = [1, 1]} : vector<96x128xf32> to vector<32x128xf32>
    %171 = vector.extract_strided_slice %161 {offsets = [32, 0], sizes = [32, 128], strides = [1, 1]} : vector<96x128xf32> to vector<32x128xf32>
    %172 = arith.addf %170, %171 : vector<32x128xf32>
    %173 = arith.negf %172 : vector<32x128xf32>
    %174 = math.exp %173 : vector<32x128xf32>
    %cst_28 = arith.constant 1.000000e+00 : f32
    %175 = vector.broadcast %cst_28 : f32 to vector<32x128xf32>
    %176 = arith.addf %175, %174 : vector<32x128xf32>
    %177 = arith.divf %175, %176 : vector<32x128xf32>
    %178 = vector.extract_strided_slice %158 {offsets = [64, 0], sizes = [32, 128], strides = [1, 1]} : vector<96x128xf32> to vector<32x128xf32>
    %179 = vector.extract_strided_slice %161 {offsets = [64, 0], sizes = [32, 128], strides = [1, 1]} : vector<96x128xf32> to vector<32x128xf32>
    %180 = arith.mulf %169, %179 : vector<32x128xf32>
    %181 = arith.addf %178, %180 : vector<32x128xf32>
    %182 = math.tanh %181 : vector<32x128xf32>
    %cst_29 = arith.constant 1.000000e+00 : f32
    %183 = vector.broadcast %cst_29 : f32 to vector<32x128xf32>
    %184 = arith.subf %183, %177 : vector<32x128xf32>
    %185 = arith.mulf %184, %182 : vector<32x128xf32>
    %186 = arith.mulf %177, %152 : vector<32x128xf32>
    %187 = arith.addf %185, %186 : vector<32x128xf32>
    %188 = vector.extract_strided_slice %11 {offsets = [5, 0], sizes = [1, 128], strides = [1, 1]} : vector<8x128xf32> to vector<1x128xf32>
    %189 = vector.broadcast %3 : vector<96x1xf32> to vector<96x128xf32>
    %190 = vector.broadcast %188 : vector<1x128xf32> to vector<96x128xf32>
    %191 = arith.mulf %189, %190 : vector<96x128xf32>
    %192 = vector.broadcast %4 : vector<96x1xf32> to vector<96x128xf32>
    %193 = arith.addf %191, %192 : vector<96x128xf32>
    %cst_30 = arith.constant dense<0.000000e+00> : vector<96x128xf32>
    %194 = tpu.matmul %5, %187, %cst_30 {dimension_numbers = #tpu.dot_dimension_numbers<[1], [0], [0], [1], [0, 0, 1, 1], [], []>} : vector<96x32xf32>, vector<32x128xf32>, vector<96x128xf32> -> vector<96x128xf32>
    %195 = vector.broadcast %6 : vector<96x1xf32> to vector<96x128xf32>
    %196 = arith.addf %194, %195 : vector<96x128xf32>
    %197 = vector.extract_strided_slice %193 {offsets = [0, 0], sizes = [32, 128], strides = [1, 1]} : vector<96x128xf32> to vector<32x128xf32>
    %198 = vector.extract_strided_slice %196 {offsets = [0, 0], sizes = [32, 128], strides = [1, 1]} : vector<96x128xf32> to vector<32x128xf32>
    %199 = arith.addf %197, %198 : vector<32x128xf32>
    %200 = arith.negf %199 : vector<32x128xf32>
    %201 = math.exp %200 : vector<32x128xf32>
    %cst_31 = arith.constant 1.000000e+00 : f32
    %202 = vector.broadcast %cst_31 : f32 to vector<32x128xf32>
    %203 = arith.addf %202, %201 : vector<32x128xf32>
    %204 = arith.divf %202, %203 : vector<32x128xf32>
    %205 = vector.extract_strided_slice %193 {offsets = [32, 0], sizes = [32, 128], strides = [1, 1]} : vector<96x128xf32> to vector<32x128xf32>
    %206 = vector.extract_strided_slice %196 {offsets = [32, 0], sizes = [32, 128], strides = [1, 1]} : vector<96x128xf32> to vector<32x128xf32>
    %207 = arith.addf %205, %206 : vector<32x128xf32>
    %208 = arith.negf %207 : vector<32x128xf32>
    %209 = math.exp %208 : vector<32x128xf32>
    %cst_32 = arith.constant 1.000000e+00 : f32
    %210 = vector.broadcast %cst_32 : f32 to vector<32x128xf32>
    %211 = arith.addf %210, %209 : vector<32x128xf32>
    %212 = arith.divf %210, %211 : vector<32x128xf32>
    %213 = vector.extract_strided_slice %193 {offsets = [64, 0], sizes = [32, 128], strides = [1, 1]} : vector<96x128xf32> to vector<32x128xf32>
    %214 = vector.extract_strided_slice %196 {offsets = [64, 0], sizes = [32, 128], strides = [1, 1]} : vector<96x128xf32> to vector<32x128xf32>
    %215 = arith.mulf %204, %214 : vector<32x128xf32>
    %216 = arith.addf %213, %215 : vector<32x128xf32>
    %217 = math.tanh %216 : vector<32x128xf32>
    %cst_33 = arith.constant 1.000000e+00 : f32
    %218 = vector.broadcast %cst_33 : f32 to vector<32x128xf32>
    %219 = arith.subf %218, %212 : vector<32x128xf32>
    %220 = arith.mulf %219, %217 : vector<32x128xf32>
    %221 = arith.mulf %212, %187 : vector<32x128xf32>
    %222 = arith.addf %220, %221 : vector<32x128xf32>
    %223 = vector.extract_strided_slice %11 {offsets = [6, 0], sizes = [1, 128], strides = [1, 1]} : vector<8x128xf32> to vector<1x128xf32>
    %224 = vector.broadcast %3 : vector<96x1xf32> to vector<96x128xf32>
    %225 = vector.broadcast %223 : vector<1x128xf32> to vector<96x128xf32>
    %226 = arith.mulf %224, %225 : vector<96x128xf32>
    %227 = vector.broadcast %4 : vector<96x1xf32> to vector<96x128xf32>
    %228 = arith.addf %226, %227 : vector<96x128xf32>
    %cst_34 = arith.constant dense<0.000000e+00> : vector<96x128xf32>
    %229 = tpu.matmul %5, %222, %cst_34 {dimension_numbers = #tpu.dot_dimension_numbers<[1], [0], [0], [1], [0, 0, 1, 1], [], []>} : vector<96x32xf32>, vector<32x128xf32>, vector<96x128xf32> -> vector<96x128xf32>
    %230 = vector.broadcast %6 : vector<96x1xf32> to vector<96x128xf32>
    %231 = arith.addf %229, %230 : vector<96x128xf32>
    %232 = vector.extract_strided_slice %228 {offsets = [0, 0], sizes = [32, 128], strides = [1, 1]} : vector<96x128xf32> to vector<32x128xf32>
    %233 = vector.extract_strided_slice %231 {offsets = [0, 0], sizes = [32, 128], strides = [1, 1]} : vector<96x128xf32> to vector<32x128xf32>
    %234 = arith.addf %232, %233 : vector<32x128xf32>
    %235 = arith.negf %234 : vector<32x128xf32>
    %236 = math.exp %235 : vector<32x128xf32>
    %cst_35 = arith.constant 1.000000e+00 : f32
    %237 = vector.broadcast %cst_35 : f32 to vector<32x128xf32>
    %238 = arith.addf %237, %236 : vector<32x128xf32>
    %239 = arith.divf %237, %238 : vector<32x128xf32>
    %240 = vector.extract_strided_slice %228 {offsets = [32, 0], sizes = [32, 128], strides = [1, 1]} : vector<96x128xf32> to vector<32x128xf32>
    %241 = vector.extract_strided_slice %231 {offsets = [32, 0], sizes = [32, 128], strides = [1, 1]} : vector<96x128xf32> to vector<32x128xf32>
    %242 = arith.addf %240, %241 : vector<32x128xf32>
    %243 = arith.negf %242 : vector<32x128xf32>
    %244 = math.exp %243 : vector<32x128xf32>
    %cst_36 = arith.constant 1.000000e+00 : f32
    %245 = vector.broadcast %cst_36 : f32 to vector<32x128xf32>
    %246 = arith.addf %245, %244 : vector<32x128xf32>
    %247 = arith.divf %245, %246 : vector<32x128xf32>
    %248 = vector.extract_strided_slice %228 {offsets = [64, 0], sizes = [32, 128], strides = [1, 1]} : vector<96x128xf32> to vector<32x128xf32>
    %249 = vector.extract_strided_slice %231 {offsets = [64, 0], sizes = [32, 128], strides = [1, 1]} : vector<96x128xf32> to vector<32x128xf32>
    %250 = arith.mulf %239, %249 : vector<32x128xf32>
    %251 = arith.addf %248, %250 : vector<32x128xf32>
    %252 = math.tanh %251 : vector<32x128xf32>
    %cst_37 = arith.constant 1.000000e+00 : f32
    %253 = vector.broadcast %cst_37 : f32 to vector<32x128xf32>
    %254 = arith.subf %253, %247 : vector<32x128xf32>
    %255 = arith.mulf %254, %252 : vector<32x128xf32>
    %256 = arith.mulf %247, %222 : vector<32x128xf32>
    %257 = arith.addf %255, %256 : vector<32x128xf32>
    %258 = vector.extract_strided_slice %11 {offsets = [7, 0], sizes = [1, 128], strides = [1, 1]} : vector<8x128xf32> to vector<1x128xf32>
    %259 = vector.broadcast %3 : vector<96x1xf32> to vector<96x128xf32>
    %260 = vector.broadcast %258 : vector<1x128xf32> to vector<96x128xf32>
    %261 = arith.mulf %259, %260 : vector<96x128xf32>
    %262 = vector.broadcast %4 : vector<96x1xf32> to vector<96x128xf32>
    %263 = arith.addf %261, %262 : vector<96x128xf32>
    %cst_38 = arith.constant dense<0.000000e+00> : vector<96x128xf32>
    %264 = tpu.matmul %5, %257, %cst_38 {dimension_numbers = #tpu.dot_dimension_numbers<[1], [0], [0], [1], [0, 0, 1, 1], [], []>} : vector<96x32xf32>, vector<32x128xf32>, vector<96x128xf32> -> vector<96x128xf32>
    %265 = vector.broadcast %6 : vector<96x1xf32> to vector<96x128xf32>
    %266 = arith.addf %264, %265 : vector<96x128xf32>
    %267 = vector.extract_strided_slice %263 {offsets = [0, 0], sizes = [32, 128], strides = [1, 1]} : vector<96x128xf32> to vector<32x128xf32>
    %268 = vector.extract_strided_slice %266 {offsets = [0, 0], sizes = [32, 128], strides = [1, 1]} : vector<96x128xf32> to vector<32x128xf32>
    %269 = arith.addf %267, %268 : vector<32x128xf32>
    %270 = arith.negf %269 : vector<32x128xf32>
    %271 = math.exp %270 : vector<32x128xf32>
    %cst_39 = arith.constant 1.000000e+00 : f32
    %272 = vector.broadcast %cst_39 : f32 to vector<32x128xf32>
    %273 = arith.addf %272, %271 : vector<32x128xf32>
    %274 = arith.divf %272, %273 : vector<32x128xf32>
    %275 = vector.extract_strided_slice %263 {offsets = [32, 0], sizes = [32, 128], strides = [1, 1]} : vector<96x128xf32> to vector<32x128xf32>
    %276 = vector.extract_strided_slice %266 {offsets = [32, 0], sizes = [32, 128], strides = [1, 1]} : vector<96x128xf32> to vector<32x128xf32>
    %277 = arith.addf %275, %276 : vector<32x128xf32>
    %278 = arith.negf %277 : vector<32x128xf32>
    %279 = math.exp %278 : vector<32x128xf32>
    %cst_40 = arith.constant 1.000000e+00 : f32
    %280 = vector.broadcast %cst_40 : f32 to vector<32x128xf32>
    %281 = arith.addf %280, %279 : vector<32x128xf32>
    %282 = arith.divf %280, %281 : vector<32x128xf32>
    %283 = vector.extract_strided_slice %263 {offsets = [64, 0], sizes = [32, 128], strides = [1, 1]} : vector<96x128xf32> to vector<32x128xf32>
    %284 = vector.extract_strided_slice %266 {offsets = [64, 0], sizes = [32, 128], strides = [1, 1]} : vector<96x128xf32> to vector<32x128xf32>
    %285 = arith.mulf %274, %284 : vector<32x128xf32>
    %286 = arith.addf %283, %285 : vector<32x128xf32>
    %287 = math.tanh %286 : vector<32x128xf32>
    %cst_41 = arith.constant 1.000000e+00 : f32
    %288 = vector.broadcast %cst_41 : f32 to vector<32x128xf32>
    %289 = arith.subf %288, %282 : vector<32x128xf32>
    %290 = arith.mulf %289, %287 : vector<32x128xf32>
    %291 = arith.mulf %282, %257 : vector<32x128xf32>
    %292 = arith.addf %290, %291 : vector<32x128xf32>
    %c0_42 = arith.constant 0 : index
    %c0_43 = arith.constant 0 : index
    %293 = vector.load %arg2[%c0_42, %c0_43] : memref<32x128xf32, #tpu.memory_space<vmem>>, vector<32x128xf32>
    %294 = tpu.concatenate %292, %293 in 0 : vector<32x128xf32>, vector<32x128xf32> -> vector<64x128xf32>
    %c0_44 = arith.constant 0 : index
    %c0_45 = arith.constant 0 : index
    %295 = vector.load %arg7[%c0_44, %c0_45] : memref<64x64xf32, #tpu.memory_space<vmem>>, vector<64x64xf32>
    %cst_46 = arith.constant dense<0.000000e+00> : vector<64x128xf32>
    %296 = tpu.matmul %295, %294, %cst_46 {dimension_numbers = #tpu.dot_dimension_numbers<[1], [0], [0], [1], [0, 0, 1, 1], [], []>} : vector<64x64xf32>, vector<64x128xf32>, vector<64x128xf32> -> vector<64x128xf32>
    %c0_47 = arith.constant 0 : index
    %c0_48 = arith.constant 0 : index
    %297 = vector.load %arg8[%c0_47, %c0_48] : memref<64x1xf32, #tpu.memory_space<vmem>>, vector<64x1xf32>
    %298 = vector.broadcast %297 : vector<64x1xf32> to vector<64x128xf32>
    %299 = arith.addf %296, %298 : vector<64x128xf32>
    %cst_49 = arith.constant 0.000000e+00 : f32
    %300 = vector.broadcast %cst_49 : f32 to vector<64x128xf32>
    %301 = arith.maximumf %299, %300 : vector<64x128xf32>
    %c0_50 = arith.constant 0 : index
    %c0_51 = arith.constant 0 : index
    %302 = vector.load %arg9[%c0_50, %c0_51] : memref<1x64xf32, #tpu.memory_space<vmem>>, vector<1x64xf32>
    %cst_52 = arith.constant dense<0.000000e+00> : vector<1x128xf32>
    %303 = tpu.matmul %302, %301, %cst_52 {dimension_numbers = #tpu.dot_dimension_numbers<[1], [0], [0], [1], [0, 0, 1, 1], [], []>} : vector<1x64xf32>, vector<64x128xf32>, vector<1x128xf32> -> vector<1x128xf32>
    %c0_53 = arith.constant 0 : index
    %c0_54 = arith.constant 0 : index
    %304 = vector.load %arg10[%c0_53, %c0_54] : memref<1x1xf32, #tpu.memory_space<vmem>>, vector<1x1xf32>
    %305 = vector.broadcast %304 : vector<1x1xf32> to vector<1x128xf32>
    %306 = arith.addf %303, %305 : vector<1x128xf32>
    %307 = vector.broadcast %1 : f32 to vector<1x128xf32>
    %308 = arith.mulf %306, %307 : vector<1x128xf32>
    %309 = vector.broadcast %0 : f32 to vector<1x128xf32>
    %310 = arith.addf %308, %309 : vector<1x128xf32>
    %c0_55 = arith.constant 0 : index
    %c0_56 = arith.constant 0 : index
    %311 = vector.load %arg11[%c0_55, %c0_56] : memref<1x128xf32, #tpu.memory_space<vmem>>, vector<1x128xf32>
    tpu.vector_store %arg11[%c0_55, %c0_56], %310 {strides = array<i32>} : memref<1x128xf32, #tpu.memory_space<vmem>>, vector<1x128xf32>,
    return
  }
}

</mosaic_0001>

<llo_original>
// kernel: tpu_custom_call.1
$region0: #{tpu_custom_call.1}
  #allocation0 [shape = 'u32[]', space=smem, size = 0x4, offset = 0x4, fixed_abs, tag = 'smem constant byte address 0x4 - core index']
  #allocation1 [shape = 'u32[144,128]{1,0:T(1,128)}', space=vmem, size = 0x12000, scoped, tag = 'internal scratch']
  #allocation2 [shape = 'f32[1,1]{1,0:T(1,128)S(1)}', space=vmem, size = 0x200, scoped, tag = 'scoped memory for tpu_custom_call.1']
  %s0 = inlined_call_operand.vmem [shape: f32[3], index: 0, kind: input, shape index: {}]
  %s1 = inlined_call_operand.vmem [shape: f32[8,128], index: 1, kind: input, shape index: {}]
  %s2 = inlined_call_operand.vmem [shape: f32[32,128], index: 2, kind: input, shape index: {}]
  %s3 = inlined_call_operand.vmem [shape: f32[96,1], index: 3, kind: input, shape index: {}]
  %s4 = inlined_call_operand.vmem [shape: f32[96,1], index: 4, kind: input, shape index: {}]
  %s5 = inlined_call_operand.vmem [shape: f32[96,32], index: 5, kind: input, shape index: {}]
  %s6 = inlined_call_operand.vmem [shape: f32[96,1], index: 6, kind: input, shape index: {}]
  %s7 = inlined_call_operand.vmem [shape: f32[64,64], index: 7, kind: input, shape index: {}]
  %s8 = inlined_call_operand.vmem [shape: f32[64,1], index: 8, kind: input, shape index: {}]
  %s9 = inlined_call_operand.vmem [shape: f32[1,64], index: 9, kind: input, shape index: {}]
  %s10 = inlined_call_operand.<no memory space> [shape: f32[1,1], index: 10, kind: input, shape index: {}]
  %s11 = inlined_call_operand.hbm [shape: f32[1,128], index: 11, kind: output, shape index: {}]
  %s12 = sld [smem:[#allocation0]]
  $region58: #{tpu_custom_call.1} parent=0
    _
  %s14 = ssub.s32 1, %s12
  %s15 = scalar_select 0, %s14, %s12
  %v16 = vstv %s10
  %17 = vst [vmem:[#allocation2] sm:$0x1] %v16
  $region1: #{tpu_custom_call.1} parent=0
    #allocation3 [shape = 'u8[512]{0}', space=smem, size = 0x200, scoped, tag = 'input window, operand 0, single buffered']
    #allocation4 [shape = 's32[1]{0}', space=sflag, size = 0x4, scoped, tag = 'scoped memory for tpu_custom_call.1']
    #allocation5 [shape = 's32[1]{0}', space=sflag, size = 0x4, scoped, tag = 'scoped memory for tpu_custom_call.1']
    #allocation6 [shape = 'u8[512]{0}', space=vmem, size = 0x400, scoped, tag = 'output window, operand 0, single buffered']
    %18 = vsyncpa [#allocation5], 0
    %19 = vsyncpa [#allocation4], 0
    // Predicated region
    $region2: #{tpu_custom_call.1} parent=1 // pred_check
      _
    $region3: #{tpu_custom_call.1} parent=1 // pred_check_branch
      %21 = sbr.rel (0) target = $region5
    $region4: #{tpu_custom_call.1} parent=1 // pred_region
      %s23 = ssub.s32 16, 16
      %24 = vsyncadd [#allocation5], %s23
      %s26 = sshll.u32 %s0, 4
      %s27 = int_to_ptr.vmem [resolvable:$true] %s26
      %29 = dma.vmem_to_smem %s27, 16, [#allocation3], [#allocation5]
    $region5: #{tpu_custom_call.1} parent=1 // pred_fallthru
      _
    // Predicated region
    $region6: #{tpu_custom_call.1} parent=1 // pred_check
      _
    $region7: #{tpu_custom_call.1} parent=1 // pred_check_branch
      %31 = sbr.rel (0) target = $region9
    $region8: #{tpu_custom_call.1} parent=1 // pred_region
      _
    $region9: #{tpu_custom_call.1} parent=1 // pred_fallthru
      _
    // Predicated region
    $region10: #{tpu_custom_call.1} parent=1 // pred_check
      _
    $region11: #{tpu_custom_call.1} parent=1 // pred_check_branch
      %33 = sbr.rel (0) target = $region13
    $region12: #{tpu_custom_call.1} parent=1 // pred_region
      _
    $region13: #{tpu_custom_call.1} parent=1 // pred_fallthru
      _
    // Predicated region
    $region14: #{tpu_custom_call.1} parent=1 // pred_check
      _
    $region15: #{tpu_custom_call.1} parent=1 // pred_check_branch
      %35 = sbr.rel (0) target = $region17
    $region16: #{tpu_custom_call.1} parent=1 // pred_region
      _
    $region17: #{tpu_custom_call.1} parent=1 // pred_fallthru
      _
    // Predicated region
    $region18: #{tpu_custom_call.1} parent=1 // pred_check
      _
    $region19: #{tpu_custom_call.1} parent=1 // pred_check_branch
      %37 = sbr.rel (0) target = $region21
    $region20: #{tpu_custom_call.1} parent=1 // pred_region
      _
    $region21: #{tpu_custom_call.1} parent=1 // pred_fallthru
      _
    // Predicated region
    $region22: #{tpu_custom_call.1} parent=1 // pred_check
      _
    $region23: #{tpu_custom_call.1} parent=1 // pred_check_branch
      %39 = sbr.rel (0) target = $region25
    $region24: #{tpu_custom_call.1} parent=1 // pred_region
      _
    $region25: #{tpu_custom_call.1} parent=1 // pred_fallthru
      _
    // Predicated region
    $region26: #{tpu_custom_call.1} parent=1 // pred_check
      _
    $region27: #{tpu_custom_call.1} parent=1 // pred_check_branch
      %41 = sbr.rel (0) target = $region29
    $region28: #{tpu_custom_call.1} parent=1 // pred_region
      _
    $region29: #{tpu_custom_call.1} parent=1 // pred_fallthru
      _
    // Predicated region
    $region30: #{tpu_custom_call.1} parent=1 // pred_check
      _
    $region31: #{tpu_custom_call.1} parent=1 // pred_check_branch
      %43 = sbr.rel (0) target = $region33
    $region32: #{tpu_custom_call.1} parent=1 // pred_region
      _
    $region33: #{tpu_custom_call.1} parent=1 // pred_fallthru
      _
    // Predicated region
    $region34: #{tpu_custom_call.1} parent=1 // pred_check
      _
    $region35: #{tpu_custom_call.1} parent=1 // pred_check_branch
      %45 = sbr.rel (0) target = $region37
    $region36: #{tpu_custom_call.1} parent=1 // pred_region
      _
    $region37: #{tpu_custom_call.1} parent=1 // pred_fallthru
      _
    // Predicated region
    $region38: #{tpu_custom_call.1} parent=1 // pred_check
      _
    $region39: #{tpu_custom_call.1} parent=1 // pred_check_branch
      %47 = sbr.rel (0) target = $region41
    $region40: #{tpu_custom_call.1} parent=1 // pred_region
      _
    $region41: #{tpu_custom_call.1} parent=1 // pred_fallthru
      _
    // Predicated region
    $region42: #{tpu_custom_call.1} parent=1 // pred_check
      _
    $region43: #{tpu_custom_call.1} parent=1 // pred_check_branch
      %49 = sbr.rel (0) target = $region45
    $region44: #{tpu_custom_call.1} parent=1 // pred_region
      _
    $region45: #{tpu_custom_call.1} parent=1 // pred_fallthru
      _
    // Predicated region
    $region46: #{tpu_custom_call.1} parent=1 // pred_check
      _
    $region47: #{tpu_custom_call.1} parent=1 // pred_check_branch
      %51 = sbr.rel (0) target = $region49
    $region48: #{tpu_custom_call.1} parent=1 // pred_region
      %52 = dma.done [#allocation5], 16
    $region49: #{tpu_custom_call.1} parent=1 // pred_fallthru
      _
    %53 = sfence
    %s54 = sld [smem:[#allocation3]]
    %s55 = sld [smem:[#allocation3 + $0x1]]
    %s56 = sld [smem:[#allocation3 + $0x2]]
    %v57 = vld [vmem:[%s3] sm:$0xff]
    %v58 = vld [vmem:[%s3 + $0x8] sm:$0xff]
    %v59 = vld [vmem:[%s3 + $0x10] sm:$0xff]
    %v60 = vld [vmem:[%s3 + $0x18] sm:$0xff]
    %v61 = vld [vmem:[%s3 + $0x20] sm:$0xff]
    %v62 = vld [vmem:[%s3 + $0x28] sm:$0xff]
    %v63 = vld [vmem:[%s3 + $0x30] sm:$0xff]
    %v64 = vld [vmem:[%s3 + $0x38] sm:$0xff]
    %v65 = vld [vmem:[%s3 + $0x40] sm:$0xff]
    %v66 = vld [vmem:[%s3 + $0x48] sm:$0xff]
    %v67 = vld [vmem:[%s3 + $0x50] sm:$0xff]
    %v68 = vld [vmem:[%s3 + $0x58] sm:$0xff]
    %v69 = vld [vmem:[%s4] sm:$0xff]
    %v70 = vld [vmem:[%s4 + $0x8] sm:$0xff]
    %v71 = vld [vmem:[%s4 + $0x10] sm:$0xff]
    %v72 = vld [vmem:[%s4 + $0x18] sm:$0xff]
    %v73 = vld [vmem:[%s4 + $0x20] sm:$0xff]
    %v74 = vld [vmem:[%s4 + $0x28] sm:$0xff]
    %v75 = vld [vmem:[%s4 + $0x30] sm:$0xff]
    %v76 = vld [vmem:[%s4 + $0x38] sm:$0xff]
    %v77 = vld [vmem:[%s4 + $0x40] sm:$0xff]
    %v78 = vld [vmem:[%s4 + $0x48] sm:$0xff]
    %v79 = vld [vmem:[%s4 + $0x50] sm:$0xff]
    %v80 = vld [vmem:[%s4 + $0x58] sm:$0xff]
    %v81 = vld [vmem:[%s5] sm:$0xff]
    %v82 = vld [vmem:[%s5 + $0x8] sm:$0xff]
    %v83 = vld [vmem:[%s5 + $0x10] sm:$0xff]
    %v84 = vld [vmem:[%s5 + $0x18] sm:$0xff]
    %v85 = vld [vmem:[%s5 + $0x20] sm:$0xff]
    %v86 = vld [vmem:[%s5 + $0x28] sm:$0xff]
    %v87 = vld [vmem:[%s5 + $0x30] sm:$0xff]
    %v88 = vld [vmem:[%s5 + $0x38] sm:$0xff]
    %v89 = vld [vmem:[%s5 + $0x40] sm:$0xff]
    %v90 = vld [vmem:[%s5 + $0x48] sm:$0xff]
    %v91 = vld [vmem:[%s5 + $0x50] sm:$0xff]
    %v92 = vld [vmem:[%s5 + $0x58] sm:$0xff]
    %v93 = vld [vmem:[%s6] sm:$0xff]
    %v94 = vld [vmem:[%s6 + $0x8] sm:$0xff]
    %v95 = vld [vmem:[%s6 + $0x10] sm:$0xff]
    %v96 = vld [vmem:[%s6 + $0x18] sm:$0xff]
    %v97 = vld [vmem:[%s6 + $0x20] sm:$0xff]
    %v98 = vld [vmem:[%s6 + $0x28] sm:$0xff]
    %v99 = vld [vmem:[%s6 + $0x30] sm:$0xff]
    %v100 = vld [vmem:[%s6 + $0x38] sm:$0xff]
    %v101 = vld [vmem:[%s6 + $0x40] sm:$0xff]
    %v102 = vld [vmem:[%s6 + $0x48] sm:$0xff]
    %v103 = vld [vmem:[%s6 + $0x50] sm:$0xff]
    %v104 = vld [vmem:[%s6 + $0x58] sm:$0xff]
    %v105 = vld [vmem:[%s1] sm:$0xff]
    %v106 = vstv %s54
    %v107 = vsub.f32 %v105, %v106
    %v108 = vstv %s56
    %v109 = vmul.f32 %v107, %v108
    %111 = vset.pattern.permute.xlu0 0
    %112 = vperm.xlu0 %111, %v57
    %v113 = vpop.permute.xlu0 %112
    %116 = vset.pattern.permute.xlu0 0
    %117 = vperm.xlu0 %116, %v58
    %v118 = vpop.permute.xlu0 %117
    %121 = vset.pattern.permute.xlu0 0
    %122 = vperm.xlu0 %121, %v59
    %v123 = vpop.permute.xlu0 %122
    %126 = vset.pattern.permute.xlu0 0
    %127 = vperm.xlu0 %126, %v60
    %v128 = vpop.permute.xlu0 %127
    %131 = vset.pattern.permute.xlu0 0
    %132 = vperm.xlu0 %131, %v61
    %v133 = vpop.permute.xlu0 %132
    %136 = vset.pattern.permute.xlu0 0
    %137 = vperm.xlu0 %136, %v62
    %v138 = vpop.permute.xlu0 %137
    %141 = vset.pattern.permute.xlu0 0
    %142 = vperm.xlu0 %141, %v63
    %v143 = vpop.permute.xlu0 %142
    %146 = vset.pattern.permute.xlu0 0
    %147 = vperm.xlu0 %146, %v64
    %v148 = vpop.permute.xlu0 %147
    %151 = vset.pattern.permute.xlu0 0
    %152 = vperm.xlu0 %151, %v65
    %v153 = vpop.permute.xlu0 %152
    %156 = vset.pattern.permute.xlu0 0
    %157 = vperm.xlu0 %156, %v66
    %v158 = vpop.permute.xlu0 %157
    %161 = vset.pattern.permute.xlu0 0
    %162 = vperm.xlu0 %161, %v67
    %v163 = vpop.permute.xlu0 %162
    %166 = vset.pattern.permute.xlu0 0
    %167 = vperm.xlu0 %166, %v68
    %v168 = vpop.permute.xlu0 %167
    %v170 = vlaneseq
    %v171 = vshrl.u32 %v170, 7
    %v172 = vsub.s32 0, %v171
    %v173 = vrot.slane %v109, %v172
    %v174 = vmul.f32 %v113, %v173
    %v175 = vmul.f32 %v118, %v173
    %v176 = vmul.f32 %v123, %v173
    %v177 = vmul.f32 %v128, %v173
    %v178 = vmul.f32 %v133, %v173
    %v179 = vmul.f32 %v138, %v173
    %v180 = vmul.f32 %v143, %v173
    %v181 = vmul.f32 %v148, %v173
    %v182 = vmul.f32 %v153, %v173
    %v183 = vmul.f32 %v158, %v173
    %v184 = vmul.f32 %v163, %v173
    %v185 = vmul.f32 %v168, %v173
    %187 = vset.pattern.permute.xlu0 0
    %188 = vperm.xlu0 %187, %v69
    %v189 = vpop.permute.xlu0 %188
    %192 = vset.pattern.permute.xlu0 0
    %193 = vperm.xlu0 %192, %v70
    %v194 = vpop.permute.xlu0 %193
    %197 = vset.pattern.permute.xlu0 0
    %198 = vperm.xlu0 %197, %v71
    %v199 = vpop.permute.xlu0 %198
    %202 = vset.pattern.permute.xlu0 0
    %203 = vperm.xlu0 %202, %v72
    %v204 = vpop.permute.xlu0 %203
    %207 = vset.pattern.permute.xlu0 0
    %208 = vperm.xlu0 %207, %v73
    %v209 = vpop.permute.xlu0 %208
    %212 = vset.pattern.permute.xlu0 0
    %213 = vperm.xlu0 %212, %v74
    %v214 = vpop.permute.xlu0 %213
    %217 = vset.pattern.permute.xlu0 0
    %218 = vperm.xlu0 %217, %v75
    %v219 = vpop.permute.xlu0 %218
    %222 = vset.pattern.permute.xlu0 0
    %223 = vperm.xlu0 %222, %v76
    %v224 = vpop.permute.xlu0 %223
    %227 = vset.pattern.permute.xlu0 0
    %228 = vperm.xlu0 %227, %v77
    %v229 = vpop.permute.xlu0 %228
    %232 = vset.pattern.permute.xlu0 0
    %233 = vperm.xlu0 %232, %v78
    %v234 = vpop.permute.xlu0 %233
    %237 = vset.pattern.permute.xlu0 0
    %238 = vperm.xlu0 %237, %v79
    %v239 = vpop.permute.xlu0 %238
    %242 = vset.pattern.permute.xlu0 0
    %243 = vperm.xlu0 %242, %v80
    %v244 = vpop.permute.xlu0 %243
    %v246 = vadd.f32 %v174, %v189
    %v247 = vadd.f32 %v175, %v194
    %v248 = vadd.f32 %v176, %v199
    %v249 = vadd.f32 %v177, %v204
    %v250 = vadd.f32 %v178, %v209
    %v251 = vadd.f32 %v179, %v214
    %v252 = vadd.f32 %v180, %v219
    %v253 = vadd.f32 %v181, %v224
    %v254 = vadd.f32 %v182, %v229
    %v255 = vadd.f32 %v183, %v234
    %v256 = vadd.f32 %v184, %v239
    %v257 = vadd.f32 %v185, %v244
    %259 = vset.pattern.permute.xlu0 0
    %260 = vperm.xlu0 %259, %v93
    %v261 = vpop.permute.xlu0 %260
    %264 = vset.pattern.permute.xlu0 0
    %265 = vperm.xlu0 %264, %v94
    %v266 = vpop.permute.xlu0 %265
    %269 = vset.pattern.permute.xlu0 0
    %270 = vperm.xlu0 %269, %v95
    %v271 = vpop.permute.xlu0 %270
    %274 = vset.pattern.permute.xlu0 0
    %275 = vperm.xlu0 %274, %v96
    %v276 = vpop.permute.xlu0 %275
    %279 = vset.pattern.permute.xlu0 0
    %280 = vperm.xlu0 %279, %v97
    %v281 = vpop.permute.xlu0 %280
    %284 = vset.pattern.permute.xlu0 0
    %285 = vperm.xlu0 %284, %v98
    %v286 = vpop.permute.xlu0 %285
    %289 = vset.pattern.permute.xlu0 0
    %290 = vperm.xlu0 %289, %v99
    %v291 = vpop.permute.xlu0 %290
    %294 = vset.pattern.permute.xlu0 0
    %295 = vperm.xlu0 %294, %v100
    %v296 = vpop.permute.xlu0 %295
    %299 = vset.pattern.permute.xlu0 0
    %300 = vperm.xlu0 %299, %v101
    %v301 = vpop.permute.xlu0 %300
    %304 = vset.pattern.permute.xlu0 0
    %305 = vperm.xlu0 %304, %v102
    %v306 = vpop.permute.xlu0 %305
    %309 = vset.pattern.permute.xlu0 0
    %310 = vperm.xlu0 %309, %v103
    %v311 = vpop.permute.xlu0 %310
    %314 = vset.pattern.permute.xlu0 0
    %315 = vperm.xlu0 %314, %v104
    %v316 = vpop.permute.xlu0 %315
    %vm318 = vcmask 261120
    %v320 = vsel %vm318, %v81, 0
    %v323 = vsel %vm318, %v82, 0
    %v326 = vsel %vm318, %v83, 0
    %v329 = vsel %vm318, %v84, 0
    %v332 = vsel %vm318, %v85, 0
    %v335 = vsel %vm318, %v86, 0
    %v338 = vsel %vm318, %v87, 0
    %v341 = vsel %vm318, %v88, 0
    %v344 = vsel %vm318, %v89, 0
    %v347 = vsel %vm318, %v90, 0
    %v350 = vsel %vm318, %v91, 0
    %v353 = vsel %vm318, %v92, 0
    %355 = vmatprep.subr.mxu0 0.0
    %356 = vmatpush1.msra.mxu0 0.0
    %357 = vmatprep.subr.mxu0 0.0
    %358 = vmatpush1.msra.mxu0 0.0
    %359 = vmatprep.subr.mxu0 0.0
    %360 = vmatpush1.msra.mxu0 0.0
    %361 = vmatprep.subr.mxu0 0.0
    %362 = vmatpush1.msra.mxu0 0.0
    %363 = vmatprep.subr.mxu0 0.0
    %364 = vmatpush1.msra.mxu0 0.0
    %365 = vmatprep.subr.mxu0 0.0
    %366 = vmatpush1.msra.mxu0 0.0
    %367 = vmatprep.subr.mxu0 0.0
    %368 = vmatpush1.msra.mxu0 0.0
    %369 = vmatprep.subr.mxu0 0.0
    %370 = vmatpush1.msra.mxu0 0.0
    %371 = vmatprep.subr.mxu0 0.0
    %372 = vmatpush1.msra.mxu0 0.0
    %373 = vmatprep.subr.mxu0 0.0
    %374 = vmatpush1.msra.mxu0 0.0
    %375 = vmatprep.subr.mxu0 0.0
    %376 = vmatpush1.msra.mxu0 0.0
    %377 = vmatprep.subr.mxu0 0.0
    %378 = vmatpush1.msra.mxu0 0.0
    %379 = vmatprep.subr.mxu0 0.0
    %380 = vmatpush1.msra.mxu0 0.0
    %381 = vmatprep.subr.mxu0 0.0
    %382 = vmatpush1.msra.mxu0 0.0
    %383 = vmatprep.subr.mxu0 0.0
    %384 = vmatpush1.msra.mxu0 0.0
    %385 = vmatprep.subr.mxu0 0.0
    %386 = vmatpush1.msra.mxu0 0.0
    %387 = vmatprep.subr.mxu0 0.0
    %388 = vmatpush2.msra.mxu0 0.0
    %389 = vmatprep.subr.mxu0 0.0
    %390 = vmatpush2.msra.mxu0 0.0
    %391 = vmatprep.subr.mxu0 0.0
    %392 = vmatpush2.msra.mxu0 0.0
    %393 = vmatprep.subr.mxu0 0.0
    %394 = vmatpush2.msra.mxu0 0.0
    %395 = vmatprep.subr.mxu0 0.0
    %396 = vmatpush2.msra.mxu0 0.0
    %397 = vmatprep.subr.mxu0 0.0
    %398 = vmatpush2.msra.mxu0 0.0
    %399 = vmatprep.subr.mxu0 0.0
    %400 = vmatpush2.msra.mxu0 0.0
    %401 = vmatprep.subr.mxu0 0.0
    %402 = vmatpush2.msra.mxu0 0.0
    %403 = vmatprep.subr.mxu0 0.0
    %404 = vmatpush2.msra.mxu0 0.0
    %405 = vmatprep.subr.mxu0 0.0
    %406 = vmatpush2.msra.mxu0 0.0
    %407 = vmatprep.subr.mxu0 0.0
    %408 = vmatpush2.msra.mxu0 0.0
    %409 = vmatprep.subr.mxu0 0.0
    %410 = vmatpush2.msra.mxu0 0.0
    %411 = vmatprep.subr.mxu0 0.0
    %412 = vmatpush2.msra.mxu0 0.0
    %413 = vmatprep.subr.mxu0 0.0
    %414 = vmatpush2.msra.mxu0 0.0
    %415 = vmatprep.subr.mxu0 0.0
    %416 = vmatpush2.msra.mxu0 0.0
    %417 = vmatprep.subr.mxu0 0.0
    %418 = vmatpush2.msra.mxu0 0.0
    %419 = vmatprep.mubr.f32.mxu0 0.0
    %420 = vmatmul.mubr.f32.gmra.mxu0 %v320
    %v421 = vpop.f32.mrf.mxu0
    %v422 = vadd.f32 %v261, %v421
    %v423 = vpop.f32.mrf.mxu0
    %424 = vmatprep.mubr.f32.mxu0 0.0
    %425 = vmatmul.mubr.f32.gmra.mxu0 %v323
    %v426 = vpop.f32.mrf.mxu0
    %v427 = vadd.f32 %v266, %v426
    %v428 = vpop.f32.mrf.mxu0
    %429 = vmatprep.mubr.f32.mxu0 0.0
    %430 = vmatmul.mubr.f32.gmra.mxu0 %v326
    %v431 = vpop.f32.mrf.mxu0
    %v432 = vadd.f32 %v271, %v431
    %v433 = vpop.f32.mrf.mxu0
    %434 = vmatprep.mubr.f32.mxu0 0.0
    %435 = vmatmul.mubr.f32.gmra.mxu0 %v329
    %v436 = vpop.f32.mrf.mxu0
    %v437 = vadd.f32 %v276, %v436
    %v438 = vpop.f32.mrf.mxu0
    %439 = vmatprep.mubr.f32.mxu0 0.0
    %440 = vmatmul.mubr.f32.gmra.mxu0 %v332
    %v441 = vpop.f32.mrf.mxu0
    %v442 = vadd.f32 %v281, %v441
    %v443 = vpop.f32.mrf.mxu0
    %444 = vmatprep.mubr.f32.mxu0 0.0
    %445 = vmatmul.mubr.f32.gmra.mxu0 %v335
    %v446 = vpop.f32.mrf.mxu0
    %v447 = vadd.f32 %v286, %v446
    %v448 = vpop.f32.mrf.mxu0
    %449 = vmatprep.mubr.f32.mxu0 0.0
    %450 = vmatmul.mubr.f32.gmra.mxu0 %v338
    %v451 = vpop.f32.mrf.mxu0
    %v452 = vadd.f32 %v291, %v451
    %v453 = vpop.f32.mrf.mxu0
    %454 = vmatprep.mubr.f32.mxu0 0.0
    %455 = vmatmul.mubr.f32.gmra.mxu0 %v341
    %v456 = vpop.f32.mrf.mxu0
    %v457 = vadd.f32 %v296, %v456
    %v458 = vpop.f32.mrf.mxu0
    %459 = vmatprep.mubr.f32.mxu0 0.0
    %460 = vmatmul.mubr.f32.gmra.mxu0 %v344
    %v461 = vpop.f32.mrf.mxu0
    %v462 = vadd.f32 %v301, %v461
    %v463 = vpop.f32.mrf.mxu0
    %464 = vmatprep.mubr.f32.mxu0 0.0
    %465 = vmatmul.mubr.f32.gmra.mxu0 %v347
    %v466 = vpop.f32.mrf.mxu0
    %v467 = vadd.f32 %v306, %v466
    %v468 = vpop.f32.mrf.mxu0
    %469 = vmatprep.mubr.f32.mxu0 0.0
    %470 = vmatmul.mubr.f32.gmra.mxu0 %v350
    %v471 = vpop.f32.mrf.mxu0
    %v472 = vadd.f32 %v311, %v471
    %v473 = vpop.f32.mrf.mxu0
    %474 = vmatprep.mubr.f32.mxu0 0.0
    %475 = vmatmul.mubr.f32.gmra.mxu0 %v353
    %v476 = vpop.f32.mrf.mxu0
    %v477 = vadd.f32 %v316, %v476
    %v478 = vpop.f32.mrf.mxu0
    %479 = vdwg.mxu0
    %v480 = vadd.f32 %v246, %v422
    %v481 = vadd.f32 %v247, %v427
    %v482 = vadd.f32 %v248, %v432
    %v483 = vadd.f32 %v249, %v437
    %v484 = vxor.u32 %v480, 2147483648
    %v485 = vxor.u32 %v481, 2147483648
    %v486 = vxor.u32 %v482, 2147483648
    %v487 = vxor.u32 %v483, 2147483648
    %v488 = vmul.f32 %v484, 1.442695
    %v489 = vpow.pop %v488
    %v490 = vmul.f32 %v485, 1.442695
    %v491 = vpow.pop %v490
    %v492 = vmul.f32 %v486, 1.442695
    %v493 = vpow.pop %v492
    %v494 = vmul.f32 %v487, 1.442695
    %v495 = vpow.pop %v494
    %v496 = vadd.f32 %v489, 1.0
    %v497 = vadd.f32 %v491, 1.0
    %v498 = vadd.f32 %v493, 1.0
    %v499 = vadd.f32 %v495, 1.0
    %v500 = vrcp.pop %v496
    %v501 = vmul.f32 1.0, %v500
    %v502 = vrcp.pop %v497
    %v503 = vmul.f32 1.0, %v502
    %v504 = vrcp.pop %v498
    %v505 = vmul.f32 1.0, %v504
    %v506 = vrcp.pop %v499
    %v507 = vmul.f32 1.0, %v506
    %v508 = vadd.f32 %v250, %v442
    %v509 = vadd.f32 %v251, %v447
    %v510 = vadd.f32 %v252, %v452
    %v511 = vadd.f32 %v253, %v457
    %v512 = vxor.u32 %v508, 2147483648
    %v513 = vxor.u32 %v509, 2147483648
    %v514 = vxor.u32 %v510, 2147483648
    %v515 = vxor.u32 %v511, 2147483648
    %v516 = vmul.f32 %v512, 1.442695
    %v517 = vpow.pop %v516
    %v518 = vmul.f32 %v513, 1.442695
    %v519 = vpow.pop %v518
    %v520 = vmul.f32 %v514, 1.442695
    %v521 = vpow.pop %v520
    %v522 = vmul.f32 %v515, 1.442695
    %v523 = vpow.pop %v522
    %v524 = vadd.f32 %v517, 1.0
    %v525 = vadd.f32 %v519, 1.0
    %v526 = vadd.f32 %v521, 1.0
    %v527 = vadd.f32 %v523, 1.0
    %v528 = vrcp.pop %v524
    %v529 = vmul.f32 1.0, %v528
    %v530 = vrcp.pop %v525
    %v531 = vmul.f32 1.0, %v530
    %v532 = vrcp.pop %v526
    %v533 = vmul.f32 1.0, %v532
    %v534 = vrcp.pop %v527
    %v535 = vmul.f32 1.0, %v534
    %v536 = vmul.f32 %v501, %v462
    %v537 = vmul.f32 %v503, %v467
    %v538 = vmul.f32 %v505, %v472
    %v539 = vmul.f32 %v507, %v477
    %v540 = vadd.f32 %v254, %v536
    %v541 = vadd.f32 %v255, %v537
    %v542 = vadd.f32 %v256, %v538
    %v543 = vadd.f32 %v257, %v539
    %v544 = vtanh.pop %v540
    %v545 = vtanh.pop %v541
    %v546 = vtanh.pop %v542
    %v547 = vtanh.pop %v543
    %v548 = vsub.f32 1.0, %v529
    %v549 = vsub.f32 1.0, %v531
    %v550 = vsub.f32 1.0, %v533
    %v551 = vsub.f32 1.0, %v535
    %v552 = vmul.f32 %v548, %v544
    %v553 = vmul.f32 %v549, %v545
    %v554 = vmul.f32 %v550, %v546
    %v555 = vmul.f32 %v551, %v547
    %v556 = vmul.f32 %v529, 0.0
    %v557 = vmul.f32 %v531, 0.0
    %v558 = vmul.f32 %v533, 0.0
    %v559 = vmul.f32 %v535, 0.0
    %v560 = vadd.f32 %v552, %v556
    %v561 = vadd.f32 %v553, %v557
    %v562 = vadd.f32 %v554, %v558
    %v563 = vadd.f32 %v555, %v559
    %v564 = vlaneseq
    %v565 = vshrl.u32 %v564, 7
    %v566 = vsub.s32 1, %v565
    %v567 = vrot.slane %v109, %v566
    %v568 = vmul.f32 %v113, %v567
    %v569 = vmul.f32 %v118, %v567
    %v570 = vmul.f32 %v123, %v567
    %v571 = vmul.f32 %v128, %v567
    %v572 = vmul.f32 %v133, %v567
    %v573 = vmul.f32 %v138, %v567
    %v574 = vmul.f32 %v143, %v567
    %v575 = vmul.f32 %v148, %v567
    %v576 = vmul.f32 %v153, %v567
    %v577 = vmul.f32 %v158, %v567
    %v578 = vmul.f32 %v163, %v567
    %v579 = vmul.f32 %v168, %v567
    %v580 = vadd.f32 %v568, %v189
    %v581 = vadd.f32 %v569, %v194
    %v582 = vadd.f32 %v570, %v199
    %v583 = vadd.f32 %v571, %v204
    %v584 = vadd.f32 %v572, %v209
    %v585 = vadd.f32 %v573, %v214
    %v586 = vadd.f32 %v574, %v219
    %v587 = vadd.f32 %v575, %v224
    %v588 = vadd.f32 %v576, %v229
    %v589 = vadd.f32 %v577, %v234
    %v590 = vadd.f32 %v578, %v239
    %v591 = vadd.f32 %v579, %v244
    %592 = vmatprep.subr.mxu0 0.0
    %593 = vmatpush1.msra.mxu0 0.0
    %594 = vmatprep.subr.mxu0 0.0
    %595 = vmatpush1.msra.mxu0 0.0
    %596 = vmatprep.subr.mxu0 0.0
    %597 = vmatpush1.msra.mxu0 0.0
    %598 = vmatprep.subr.mxu0 0.0
    %599 = vmatpush1.msra.mxu0 0.0
    %600 = vmatprep.subr.mxu0 0.0
    %601 = vmatpush1.msra.mxu0 0.0
    %602 = vmatprep.subr.mxu0 0.0
    %603 = vmatpush1.msra.mxu0 0.0
    %604 = vmatprep.subr.mxu0 0.0
    %605 = vmatpush1.msra.mxu0 0.0
    %606 = vmatprep.subr.mxu0 0.0
    %607 = vmatpush1.msra.mxu0 0.0
    %608 = vmatprep.subr.mxu0 0.0
    %609 = vmatpush1.msra.mxu0 0.0
    %610 = vmatprep.subr.mxu0 0.0
    %611 = vmatpush1.msra.mxu0 0.0
    %612 = vmatprep.subr.mxu0 0.0
    %613 = vmatpush1.msra.mxu0 0.0
    %614 = vmatprep.subr.mxu0 0.0
    %615 = vmatpush1.msra.mxu0 0.0
    %616 = vmatprep.subr.mxu0 0.0
    %617 = vmatpush1.msra.mxu0 %v563
    %618 = vmatprep.subr.mxu0 0.0
    %619 = vmatpush1.msra.mxu0 %v562
    %620 = vmatprep.subr.mxu0 0.0
    %621 = vmatpush1.msra.mxu0 %v561
    %622 = vmatprep.subr.mxu0 0.0
    %623 = vmatpush1.msra.mxu0 %v560
    %624 = vmatprep.subr.mxu0 0.0
    %625 = vmatpush2.msra.mxu0 0.0
    %626 = vmatprep.subr.mxu0 0.0
    %627 = vmatpush2.msra.mxu0 0.0
    %628 = vmatprep.subr.mxu0 0.0
    %629 = vmatpush2.msra.mxu0 0.0
    %630 = vmatprep.subr.mxu0 0.0
    %631 = vmatpush2.msra.mxu0 0.0
    %632 = vmatprep.subr.mxu0 0.0
    %633 = vmatpush2.msra.mxu0 0.0
    %634 = vmatprep.subr.mxu0 0.0
    %635 = vmatpush2.msra.mxu0 0.0
    %636 = vmatprep.subr.mxu0 0.0
    %637 = vmatpush2.msra.mxu0 0.0
    %638 = vmatprep.subr.mxu0 0.0
    %639 = vmatpush2.msra.mxu0 0.0
    %640 = vmatprep.subr.mxu0 0.0
    %641 = vmatpush2.msra.mxu0 0.0
    %642 = vmatprep.subr.mxu0 0.0
    %643 = vmatpush2.msra.mxu0 0.0
    %644 = vmatprep.subr.mxu0 0.0
    %645 = vmatpush2.msra.mxu0 0.0
    %646 = vmatprep.subr.mxu0 0.0
    %647 = vmatpush2.msra.mxu0 0.0
    %648 = vmatprep.subr.mxu0 0.0
    %649 = vmatpush2.msra.mxu0 0.0
    %650 = vmatprep.subr.mxu0 0.0
    %651 = vmatpush2.msra.mxu0 0.0
    %652 = vmatprep.subr.mxu0 0.0
    %653 = vmatpush2.msra.mxu0 0.0
    %654 = vmatprep.subr.mxu0 0.0
    %655 = vmatpush2.msra.mxu0 0.0
    %656 = vmatprep.mubr.f32.mxu0 0.0
    %657 = vmatmul.mubr.f32.gmra.mxu0 %v320
    %v658 = vpop.f32.mrf.mxu0
    %v659 = vadd.f32 %v261, %v658
    %v660 = vpop.f32.mrf.mxu0
    %661 = vmatprep.mubr.f32.mxu0 0.0
    %662 = vmatmul.mubr.f32.gmra.mxu0 %v323
    %v663 = vpop.f32.mrf.mxu0
    %v664 = vadd.f32 %v266, %v663
    %v665 = vpop.f32.mrf.mxu0
    %666 = vmatprep.mubr.f32.mxu0 0.0
    %667 = vmatmul.mubr.f32.gmra.mxu0 %v326
    %v668 = vpop.f32.mrf.mxu0
    %v669 = vadd.f32 %v271, %v668
    %v670 = vpop.f32.mrf.mxu0
    %671 = vmatprep.mubr.f32.mxu0 0.0
    %672 = vmatmul.mubr.f32.gmra.mxu0 %v329
    %v673 = vpop.f32.mrf.mxu0
    %v674 = vadd.f32 %v276, %v673
    %v675 = vpop.f32.mrf.mxu0
    %676 = vmatprep.mubr.f32.mxu0 0.0
    %677 = vmatmul.mubr.f32.gmra.mxu0 %v332
    %v678 = vpop.f32.mrf.mxu0
    %v679 = vadd.f32 %v281, %v678
    %v680 = vpop.f32.mrf.mxu0
    %681 = vmatprep.mubr.f32.mxu0 0.0
    %682 = vmatmul.mubr.f32.gmra.mxu0 %v335
    %v683 = vpop.f32.mrf.mxu0
    %v684 = vadd.f32 %v286, %v683
    %v685 = vpop.f32.mrf.mxu0
    %686 = vmatprep.mubr.f32.mxu0 0.0
    %687 = vmatmul.mubr.f32.gmra.mxu0 %v338
    %v688 = vpop.f32.mrf.mxu0
    %v689 = vadd.f32 %v291, %v688
    %v690 = vpop.f32.mrf.mxu0
    %691 = vmatprep.mubr.f32.mxu0 0.0
    %692 = vmatmul.mubr.f32.gmra.mxu0 %v341
    %v693 = vpop.f32.mrf.mxu0
    %v694 = vadd.f32 %v296, %v693
    %v695 = vpop.f32.mrf.mxu0
    %696 = vmatprep.mubr.f32.mxu0 0.0
    %697 = vmatmul.mubr.f32.gmra.mxu0 %v344
    %v698 = vpop.f32.mrf.mxu0
    %v699 = vadd.f32 %v301, %v698
    %v700 = vpop.f32.mrf.mxu0
    %701 = vmatprep.mubr.f32.mxu0 0.0
    %702 = vmatmul.mubr.f32.gmra.mxu0 %v347
    %v703 = vpop.f32.mrf.mxu0
    %v704 = vadd.f32 %v306, %v703
    %v705 = vpop.f32.mrf.mxu0
    %706 = vmatprep.mubr.f32.mxu0 0.0
    %707 = vmatmul.mubr.f32.gmra.mxu0 %v350
    %v708 = vpop.f32.mrf.mxu0
    %v709 = vadd.f32 %v311, %v708
    %v710 = vpop.f32.mrf.mxu0
    %711 = vmatprep.mubr.f32.mxu0 0.0
    %712 = vmatmul.mubr.f32.gmra.mxu0 %v353
    %v713 = vpop.f32.mrf.mxu0
    %v714 = vadd.f32 %v316, %v713
    %v715 = vpop.f32.mrf.mxu0
    %716 = vdwg.mxu0
    %v717 = vadd.f32 %v580, %v659
    %v718 = vadd.f32 %v581, %v664
    %v719 = vadd.f32 %v582, %v669
    %v720 = vadd.f32 %v583, %v674
    %v721 = vxor.u32 %v717, 2147483648
    %v722 = vxor.u32 %v718, 2147483648
    %v723 = vxor.u32 %v719, 2147483648
    %v724 = vxor.u32 %v720, 2147483648
    %v725 = vmul.f32 %v721, 1.442695
    %v726 = vpow.pop %v725
    %v727 = vmul.f32 %v722, 1.442695
    %v728 = vpow.pop %v727
    %v729 = vmul.f32 %v723, 1.442695
    %v730 = vpow.pop %v729
    %v731 = vmul.f32 %v724, 1.442695
    %v732 = vpow.pop %v731
    %v733 = vadd.f32 %v726, 1.0
    %v734 = vadd.f32 %v728, 1.0
    %v735 = vadd.f32 %v730, 1.0
    %v736 = vadd.f32 %v732, 1.0
    %v737 = vrcp.pop %v733
    %v738 = vmul.f32 1.0, %v737
    %v739 = vrcp.pop %v734
    %v740 = vmul.f32 1.0, %v739
    %v741 = vrcp.pop %v735
    %v742 = vmul.f32 1.0, %v741
    %v743 = vrcp.pop %v736
    %v744 = vmul.f32 1.0, %v743
    %v745 = vadd.f32 %v584, %v679
    %v746 = vadd.f32 %v585, %v684
    %v747 = vadd.f32 %v586, %v689
    %v748 = vadd.f32 %v587, %v694
    %v749 = vxor.u32 %v745, 2147483648
    %v750 = vxor.u32 %v746, 2147483648
    %v751 = vxor.u32 %v747, 2147483648
    %v752 = vxor.u32 %v748, 2147483648
    %v753 = vmul.f32 %v749, 1.442695
    %v754 = vpow.pop %v753
    %v755 = vmul.f32 %v750, 1.442695
    %v756 = vpow.pop %v755
    %v757 = vmul.f32 %v751, 1.442695
    %v758 = vpow.pop %v757
    %v759 = vmul.f32 %v752, 1.442695
    %v760 = vpow.pop %v759
    %v761 = vadd.f32 %v754, 1.0
    %v762 = vadd.f32 %v756, 1.0
    %v763 = vadd.f32 %v758, 1.0
    %v764 = vadd.f32 %v760, 1.0
    %v765 = vrcp.pop %v761
    %v766 = vmul.f32 1.0, %v765
    %v767 = vrcp.pop %v762
    %v768 = vmul.f32 1.0, %v767
    %v769 = vrcp.pop %v763
    %v770 = vmul.f32 1.0, %v769
    %v771 = vrcp.pop %v764
    %v772 = vmul.f32 1.0, %v771
    %v773 = vmul.f32 %v738, %v699
    %v774 = vmul.f32 %v740, %v704
    %v775 = vmul.f32 %v742, %v709
    %v776 = vmul.f32 %v744, %v714
    %v777 = vadd.f32 %v588, %v773
    %v778 = vadd.f32 %v589, %v774
    %v779 = vadd.f32 %v590, %v775
    %v780 = vadd.f32 %v591, %v776
    %v781 = vtanh.pop %v777
    %v782 = vtanh.pop %v778
    %v783 = vtanh.pop %v779
    %v784 = vtanh.pop %v780
    %v785 = vsub.f32 1.0, %v766
    %v786 = vsub.f32 1.0, %v768
    %v787 = vsub.f32 1.0, %v770
    %v788 = vsub.f32 1.0, %v772
    %v789 = vmul.f32 %v785, %v781
    %v790 = vmul.f32 %v786, %v782
    %v791 = vmul.f32 %v787, %v783
    %v792 = vmul.f32 %v788, %v784
    %v793 = vmul.f32 %v766, %v560
    %v794 = vmul.f32 %v768, %v561
    %v795 = vmul.f32 %v770, %v562
    %v796 = vmul.f32 %v772, %v563
    %v797 = vadd.f32 %v789, %v793
    %v798 = vadd.f32 %v790, %v794
    %v799 = vadd.f32 %v791, %v795
    %v800 = vadd.f32 %v792, %v796
    %v801 = vlaneseq
    %v802 = vshrl.u32 %v801, 7
    %v803 = vsub.s32 2, %v802
    %v804 = vrot.slane %v109, %v803
    %v805 = vmul.f32 %v113, %v804
    %v806 = vmul.f32 %v118, %v804
    %v807 = vmul.f32 %v123, %v804
    %v808 = vmul.f32 %v128, %v804
    %v809 = vmul.f32 %v133, %v804
    %v810 = vmul.f32 %v138, %v804
    %v811 = vmul.f32 %v143, %v804
    %v812 = vmul.f32 %v148, %v804
    %v813 = vmul.f32 %v153, %v804
    %v814 = vmul.f32 %v158, %v804
    %v815 = vmul.f32 %v163, %v804
    %v816 = vmul.f32 %v168, %v804
    %v817 = vadd.f32 %v805, %v189
    %v818 = vadd.f32 %v806, %v194
    %v819 = vadd.f32 %v807, %v199
    %v820 = vadd.f32 %v808, %v204
    %v821 = vadd.f32 %v809, %v209
    %v822 = vadd.f32 %v810, %v214
    %v823 = vadd.f32 %v811, %v219
    %v824 = vadd.f32 %v812, %v224
    %v825 = vadd.f32 %v813, %v229
    %v826 = vadd.f32 %v814, %v234
    %v827 = vadd.f32 %v815, %v239
    %v828 = vadd.f32 %v816, %v244
    %829 = vmatprep.subr.mxu0 0.0
    %830 = vmatpush1.msra.mxu0 0.0
    %831 = vmatprep.subr.mxu0 0.0
    %832 = vmatpush1.msra.mxu0 0.0
    %833 = vmatprep.subr.mxu0 0.0
    %834 = vmatpush1.msra.mxu0 0.0
    %835 = vmatprep.subr.mxu0 0.0
    %836 = vmatpush1.msra.mxu0 0.0
    %837 = vmatprep.subr.mxu0 0.0
    %838 = vmatpush1.msra.mxu0 0.0
    %839 = vmatprep.subr.mxu0 0.0
    %840 = vmatpush1.msra.mxu0 0.0
    %841 = vmatprep.subr.mxu0 0.0
    %842 = vmatpush1.msra.mxu0 0.0
    %843 = vmatprep.subr.mxu0 0.0
    %844 = vmatpush1.msra.mxu0 0.0
    %845 = vmatprep.subr.mxu0 0.0
    %846 = vmatpush1.msra.mxu0 0.0
    %847 = vmatprep.subr.mxu0 0.0
    %848 = vmatpush1.msra.mxu0 0.0
    %849 = vmatprep.subr.mxu0 0.0
    %850 = vmatpush1.msra.mxu0 0.0
    %851 = vmatprep.subr.mxu0 0.0
    %852 = vmatpush1.msra.mxu0 0.0
    %853 = vmatprep.subr.mxu0 0.0
    %854 = vmatpush1.msra.mxu0 %v800
    %855 = vmatprep.subr.mxu0 0.0
    %856 = vmatpush1.msra.mxu0 %v799
    %857 = vmatprep.subr.mxu0 0.0
    %858 = vmatpush1.msra.mxu0 %v798
    %859 = vmatprep.subr.mxu0 0.0
    %860 = vmatpush1.msra.mxu0 %v797
    %861 = vmatprep.subr.mxu0 0.0
    %862 = vmatpush2.msra.mxu0 0.0
    %863 = vmatprep.subr.mxu0 0.0
    %864 = vmatpush2.msra.mxu0 0.0
    %865 = vmatprep.subr.mxu0 0.0
    %866 = vmatpush2.msra.mxu0 0.0
    %867 = vmatprep.subr.mxu0 0.0
    %868 = vmatpush2.msra.mxu0 0.0
    %869 = vmatprep.subr.mxu0 0.0
    %870 = vmatpush2.msra.mxu0 0.0
    %871 = vmatprep.subr.mxu0 0.0
    %872 = vmatpush2.msra.mxu0 0.0
    %873 = vmatprep.subr.mxu0 0.0
    %874 = vmatpush2.msra.mxu0 0.0
    %875 = vmatprep.subr.mxu0 0.0
    %876 = vmatpush2.msra.mxu0 0.0
    %877 = vmatprep.subr.mxu0 0.0
    %878 = vmatpush2.msra.mxu0 0.0
    %879 = vmatprep.subr.mxu0 0.0
    %880 = vmatpush2.msra.mxu0 0.0
    %881 = vmatprep.subr.mxu0 0.0
    %882 = vmatpush2.msra.mxu0 0.0
    %883 = vmatprep.subr.mxu0 0.0
    %884 = vmatpush2.msra.mxu0 0.0
    %885 = vmatprep.subr.mxu0 0.0
    %886 = vmatpush2.msra.mxu0 0.0
    %887 = vmatprep.subr.mxu0 0.0
    %888 = vmatpush2.msra.mxu0 0.0
    %889 = vmatprep.subr.mxu0 0.0
    %890 = vmatpush2.msra.mxu0 0.0
    %891 = vmatprep.subr.mxu0 0.0
    %892 = vmatpush2.msra.mxu0 0.0
    %893 = vmatprep.mubr.f32.mxu0 0.0
    %894 = vmatmul.mubr.f32.gmra.mxu0 %v320
    %v895 = vpop.f32.mrf.mxu0
    %v896 = vadd.f32 %v261, %v895
    %v897 = vpop.f32.mrf.mxu0
    %898 = vmatprep.mubr.f32.mxu0 0.0
    %899 = vmatmul.mubr.f32.gmra.mxu0 %v323
    %v900 = vpop.f32.mrf.mxu0
    %v901 = vadd.f32 %v266, %v900
    %v902 = vpop.f32.mrf.mxu0
    %903 = vmatprep.mubr.f32.mxu0 0.0
    %904 = vmatmul.mubr.f32.gmra.mxu0 %v326
    %v905 = vpop.f32.mrf.mxu0
    %v906 = vadd.f32 %v271, %v905
    %v907 = vpop.f32.mrf.mxu0
    %908 = vmatprep.mubr.f32.mxu0 0.0
    %909 = vmatmul.mubr.f32.gmra.mxu0 %v329
    %v910 = vpop.f32.mrf.mxu0
    %v911 = vadd.f32 %v276, %v910
    %v912 = vpop.f32.mrf.mxu0
    %913 = vmatprep.mubr.f32.mxu0 0.0
    %914 = vmatmul.mubr.f32.gmra.mxu0 %v332
    %v915 = vpop.f32.mrf.mxu0
    %v916 = vadd.f32 %v281, %v915
    %v917 = vpop.f32.mrf.mxu0
    %918 = vmatprep.mubr.f32.mxu0 0.0
    %919 = vmatmul.mubr.f32.gmra.mxu0 %v335
    %v920 = vpop.f32.mrf.mxu0
    %v921 = vadd.f32 %v286, %v920
    %v922 = vpop.f32.mrf.mxu0
    %923 = vmatprep.mubr.f32.mxu0 0.0
    %924 = vmatmul.mubr.f32.gmra.mxu0 %v338
    %v925 = vpop.f32.mrf.mxu0
    %v926 = vadd.f32 %v291, %v925
    %v927 = vpop.f32.mrf.mxu0
    %928 = vmatprep.mubr.f32.mxu0 0.0
    %929 = vmatmul.mubr.f32.gmra.mxu0 %v341
    %v930 = vpop.f32.mrf.mxu0
    %v931 = vadd.f32 %v296, %v930
    %v932 = vpop.f32.mrf.mxu0
    %933 = vmatprep.mubr.f32.mxu0 0.0
    %934 = vmatmul.mubr.f32.gmra.mxu0 %v344
    %v935 = vpop.f32.mrf.mxu0
    %v936 = vadd.f32 %v301, %v935
    %v937 = vpop.f32.mrf.mxu0
    %938 = vmatprep.mubr.f32.mxu0 0.0
    %939 = vmatmul.mubr.f32.gmra.mxu0 %v347
    %v940 = vpop.f32.mrf.mxu0
    %v941 = vadd.f32 %v306, %v940
    %v942 = vpop.f32.mrf.mxu0
    %943 = vmatprep.mubr.f32.mxu0 0.0
    %944 = vmatmul.mubr.f32.gmra.mxu0 %v350
    %v945 = vpop.f32.mrf.mxu0
    %v946 = vadd.f32 %v311, %v945
    %v947 = vpop.f32.mrf.mxu0
    %948 = vmatprep.mubr.f32.mxu0 0.0
    %949 = vmatmul.mubr.f32.gmra.mxu0 %v353
    %v950 = vpop.f32.mrf.mxu0
    %v951 = vadd.f32 %v316, %v950
    %v952 = vpop.f32.mrf.mxu0
    %953 = vdwg.mxu0
    %v954 = vadd.f32 %v817, %v896
    %v955 = vadd.f32 %v818, %v901
    %v956 = vadd.f32 %v819, %v906
    %v957 = vadd.f32 %v820, %v911
    %v958 = vxor.u32 %v954, 2147483648
    %v959 = vxor.u32 %v955, 2147483648
    %v960 = vxor.u32 %v956, 2147483648
    %v961 = vxor.u32 %v957, 2147483648
    %v962 = vmul.f32 %v958, 1.442695
    %v963 = vpow.pop %v962
    %v964 = vmul.f32 %v959, 1.442695
    %v965 = vpow.pop %v964
    %v966 = vmul.f32 %v960, 1.442695
    %v967 = vpow.pop %v966
    %v968 = vmul.f32 %v961, 1.442695
    %v969 = vpow.pop %v968
    %v970 = vadd.f32 %v963, 1.0
    %v971 = vadd.f32 %v965, 1.0
    %v972 = vadd.f32 %v967, 1.0
    %v973 = vadd.f32 %v969, 1.0
    %v974 = vrcp.pop %v970
    %v975 = vmul.f32 1.0, %v974
    %v976 = vrcp.pop %v971
    %v977 = vmul.f32 1.0, %v976
    %v978 = vrcp.pop %v972
    %v979 = vmul.f32 1.0, %v978
    %v980 = vrcp.pop %v973
    %v981 = vmul.f32 1.0, %v980
    %v982 = vadd.f32 %v821, %v916
    %v983 = vadd.f32 %v822, %v921
    %v984 = vadd.f32 %v823, %v926
    %v985 = vadd.f32 %v824, %v931
    %v986 = vxor.u32 %v982, 2147483648
    %v987 = vxor.u32 %v983, 2147483648
    %v988 = vxor.u32 %v984, 2147483648
    %v989 = vxor.u32 %v985, 2147483648
    %v990 = vmul.f32 %v986, 1.442695
    %v991 = vpow.pop %v990
    %v992 = vmul.f32 %v987, 1.442695
    %v993 = vpow.pop %v992
    %v994 = vmul.f32 %v988, 1.442695
    %v995 = vpow.pop %v994
    %v996 = vmul.f32 %v989, 1.442695
    %v997 = vpow.pop %v996
    %v998 = vadd.f32 %v991, 1.0
    %v999 = vadd.f32 %v993, 1.0
    %v1000 = vadd.f32 %v995, 1.0
    %v1001 = vadd.f32 %v997, 1.0
    %v1002 = vrcp.pop %v998
    %v1003 = vmul.f32 1.0, %v1002
    %v1004 = vrcp.pop %v999
    %v1005 = vmul.f32 1.0, %v1004
    %v1006 = vrcp.pop %v1000
    %v1007 = vmul.f32 1.0, %v1006
    %v1008 = vrcp.pop %v1001
    %v1009 = vmul.f32 1.0, %v1008
    %v1010 = vmul.f32 %v975, %v936
    %v1011 = vmul.f32 %v977, %v941
    %v1012 = vmul.f32 %v979, %v946
    %v1013 = vmul.f32 %v981, %v951
    %v1014 = vadd.f32 %v825, %v1010
    %v1015 = vadd.f32 %v826, %v1011
    %v1016 = vadd.f32 %v827, %v1012
    %v1017 = vadd.f32 %v828, %v1013
    %v1018 = vtanh.pop %v1014
    %v1019 = vtanh.pop %v1015
    %v1020 = vtanh.pop %v1016
    %v1021 = vtanh.pop %v1017
    %v1022 = vsub.f32 1.0, %v1003
    %v1023 = vsub.f32 1.0, %v1005
    %v1024 = vsub.f32 1.0, %v1007
    %v1025 = vsub.f32 1.0, %v1009
    %v1026 = vmul.f32 %v1022, %v1018
    %v1027 = vmul.f32 %v1023, %v1019
    %v1028 = vmul.f32 %v1024, %v1020
    %v1029 = vmul.f32 %v1025, %v1021
    %v1030 = vmul.f32 %v1003, %v797
    %v1031 = vmul.f32 %v1005, %v798
    %v1032 = vmul.f32 %v1007, %v799
    %v1033 = vmul.f32 %v1009, %v800
    %v1034 = vadd.f32 %v1026, %v1030
    %v1035 = vadd.f32 %v1027, %v1031
    %v1036 = vadd.f32 %v1028, %v1032
    %v1037 = vadd.f32 %v1029, %v1033
    %v1038 = vlaneseq
    %v1039 = vshrl.u32 %v1038, 7
    %v1040 = vsub.s32 3, %v1039
    %v1041 = vrot.slane %v109, %v1040
    %v1042 = vmul.f32 %v113, %v1041
    %v1043 = vmul.f32 %v118, %v1041
    %v1044 = vmul.f32 %v123, %v1041
    %v1045 = vmul.f32 %v128, %v1041
    %v1046 = vmul.f32 %v133, %v1041
    %v1047 = vmul.f32 %v138, %v1041
    %v1048 = vmul.f32 %v143, %v1041
    %v1049 = vmul.f32 %v148, %v1041
    %v1050 = vmul.f32 %v153, %v1041
    %v1051 = vmul.f32 %v158, %v1041
    %v1052 = vmul.f32 %v163, %v1041
    %v1053 = vmul.f32 %v168, %v1041
    %v1054 = vadd.f32 %v1042, %v189
    %v1055 = vadd.f32 %v1043, %v194
    %v1056 = vadd.f32 %v1044, %v199
    %v1057 = vadd.f32 %v1045, %v204
    %v1058 = vadd.f32 %v1046, %v209
    %v1059 = vadd.f32 %v1047, %v214
    %v1060 = vadd.f32 %v1048, %v219
    %v1061 = vadd.f32 %v1049, %v224
    %v1062 = vadd.f32 %v1050, %v229
    %v1063 = vadd.f32 %v1051, %v234
    %v1064 = vadd.f32 %v1052, %v239
    %v1065 = vadd.f32 %v1053, %v244
    %1066 = vmatprep.subr.mxu0 0.0
    %1067 = vmatpush1.msra.mxu0 0.0
    %1068 = vmatprep.subr.mxu0 0.0
    %1069 = vmatpush1.msra.mxu0 0.0
    %1070 = vmatprep.subr.mxu0 0.0
    %1071 = vmatpush1.msra.mxu0 0.0
    %1072 = vmatprep.subr.mxu0 0.0
    %1073 = vmatpush1.msra.mxu0 0.0
    %1074 = vmatprep.subr.mxu0 0.0
    %1075 = vmatpush1.msra.mxu0 0.0
    %1076 = vmatprep.subr.mxu0 0.0
    %1077 = vmatpush1.msra.mxu0 0.0
    %1078 = vmatprep.subr.mxu0 0.0
    %1079 = vmatpush1.msra.mxu0 0.0
    %1080 = vmatprep.subr.mxu0 0.0
    %1081 = vmatpush1.msra.mxu0 0.0
    %1082 = vmatprep.subr.mxu0 0.0
    %1083 = vmatpush1.msra.mxu0 0.0
    %1084 = vmatprep.subr.mxu0 0.0
    %1085 = vmatpush1.msra.mxu0 0.0
    %1086 = vmatprep.subr.mxu0 0.0
    %1087 = vmatpush1.msra.mxu0 0.0
    %1088 = vmatprep.subr.mxu0 0.0
    %1089 = vmatpush1.msra.mxu0 0.0
    %1090 = vmatprep.subr.mxu0 0.0
    %1091 = vmatpush1.msra.mxu0 %v1037
    %1092 = vmatprep.subr.mxu0 0.0
    %1093 = vmatpush1.msra.mxu0 %v1036
    %1094 = vmatprep.subr.mxu0 0.0
    %1095 = vmatpush1.msra.mxu0 %v1035
    %1096 = vmatprep.subr.mxu0 0.0
    %1097 = vmatpush1.msra.mxu0 %v1034
    %1098 = vmatprep.subr.mxu0 0.0
    %1099 = vmatpush2.msra.mxu0 0.0
    %1100 = vmatprep.subr.mxu0 0.0
    %1101 = vmatpush2.msra.mxu0 0.0
    %1102 = vmatprep.subr.mxu0 0.0
    %1103 = vmatpush2.msra.mxu0 0.0
    %1104 = vmatprep.subr.mxu0 0.0
    %1105 = vmatpush2.msra.mxu0 0.0
    %1106 = vmatprep.subr.mxu0 0.0
    %1107 = vmatpush2.msra.mxu0 0.0
    %1108 = vmatprep.subr.mxu0 0.0
    %1109 = vmatpush2.msra.mxu0 0.0
    %1110 = vmatprep.subr.mxu0 0.0
    %1111 = vmatpush2.msra.mxu0 0.0
    %1112 = vmatprep.subr.mxu0 0.0
    %1113 = vmatpush2.msra.mxu0 0.0
    %1114 = vmatprep.subr.mxu0 0.0
    %1115 = vmatpush2.msra.mxu0 0.0
    %1116 = vmatprep.subr.mxu0 0.0
    %1117 = vmatpush2.msra.mxu0 0.0
    %1118 = vmatprep.subr.mxu0 0.0
    %1119 = vmatpush2.msra.mxu0 0.0
    %1120 = vmatprep.subr.mxu0 0.0
    %1121 = vmatpush2.msra.mxu0 0.0
    %1122 = vmatprep.subr.mxu0 0.0
    %1123 = vmatpush2.msra.mxu0 0.0
    %1124 = vmatprep.subr.mxu0 0.0
    %1125 = vmatpush2.msra.mxu0 0.0
    %1126 = vmatprep.subr.mxu0 0.0
    %1127 = vmatpush2.msra.mxu0 0.0
    %1128 = vmatprep.subr.mxu0 0.0
    %1129 = vmatpush2.msra.mxu0 0.0
    %1130 = vmatprep.mubr.f32.mxu0 0.0
    %1131 = vmatmul.mubr.f32.gmra.mxu0 %v320
    %v1132 = vpop.f32.mrf.mxu0
    %v1133 = vadd.f32 %v261, %v1132
    %v1134 = vpop.f32.mrf.mxu0
    %1135 = vmatprep.mubr.f32.mxu0 0.0
    %1136 = vmatmul.mubr.f32.gmra.mxu0 %v323
    %v1137 = vpop.f32.mrf.mxu0
    %v1138 = vadd.f32 %v266, %v1137
    %v1139 = vpop.f32.mrf.mxu0
    %1140 = vmatprep.mubr.f32.mxu0 0.0
    %1141 = vmatmul.mubr.f32.gmra.mxu0 %v326
    %v1142 = vpop.f32.mrf.mxu0
    %v1143 = vadd.f32 %v271, %v1142
    %v1144 = vpop.f32.mrf.mxu0
    %1145 = vmatprep.mubr.f32.mxu0 0.0
    %1146 = vmatmul.mubr.f32.gmra.mxu0 %v329
    %v1147 = vpop.f32.mrf.mxu0
    %v1148 = vadd.f32 %v276, %v1147
    %v1149 = vpop.f32.mrf.mxu0
    %1150 = vmatprep.mubr.f32.mxu0 0.0
    %1151 = vmatmul.mubr.f32.gmra.mxu0 %v332
    %v1152 = vpop.f32.mrf.mxu0
    %v1153 = vadd.f32 %v281, %v1152
    %v1154 = vpop.f32.mrf.mxu0
    %1155 = vmatprep.mubr.f32.mxu0 0.0
    %1156 = vmatmul.mubr.f32.gmra.mxu0 %v335
    %v1157 = vpop.f32.mrf.mxu0
    %v1158 = vadd.f32 %v286, %v1157
    %v1159 = vpop.f32.mrf.mxu0
    %1160 = vmatprep.mubr.f32.mxu0 0.0
    %1161 = vmatmul.mubr.f32.gmra.mxu0 %v338
    %v1162 = vpop.f32.mrf.mxu0
    %v1163 = vadd.f32 %v291, %v1162
    %v1164 = vpop.f32.mrf.mxu0
    %1165 = vmatprep.mubr.f32.mxu0 0.0
    %1166 = vmatmul.mubr.f32.gmra.mxu0 %v341
    %v1167 = vpop.f32.mrf.mxu0
    %v1168 = vadd.f32 %v296, %v1167
    %v1169 = vpop.f32.mrf.mxu0
    %1170 = vmatprep.mubr.f32.mxu0 0.0
    %1171 = vmatmul.mubr.f32.gmra.mxu0 %v344
    %v1172 = vpop.f32.mrf.mxu0
    %v1173 = vadd.f32 %v301, %v1172
    %v1174 = vpop.f32.mrf.mxu0
    %1175 = vmatprep.mubr.f32.mxu0 0.0
    %1176 = vmatmul.mubr.f32.gmra.mxu0 %v347
    %v1177 = vpop.f32.mrf.mxu0
    %v1178 = vadd.f32 %v306, %v1177
    %v1179 = vpop.f32.mrf.mxu0
    %1180 = vmatprep.mubr.f32.mxu0 0.0
    %1181 = vmatmul.mubr.f32.gmra.mxu0 %v350
    %v1182 = vpop.f32.mrf.mxu0
    %v1183 = vadd.f32 %v311, %v1182
    %v1184 = vpop.f32.mrf.mxu0
    %1185 = vmatprep.mubr.f32.mxu0 0.0
    %1186 = vmatmul.mubr.f32.gmra.mxu0 %v353
    %v1187 = vpop.f32.mrf.mxu0
    %v1188 = vadd.f32 %v316, %v1187
    %v1189 = vpop.f32.mrf.mxu0
    %1190 = vdwg.mxu0
    %v1191 = vadd.f32 %v1054, %v1133
    %v1192 = vadd.f32 %v1055, %v1138
    %v1193 = vadd.f32 %v1056, %v1143
    %v1194 = vadd.f32 %v1057, %v1148
    %v1195 = vxor.u32 %v1191, 2147483648
    %v1196 = vxor.u32 %v1192, 2147483648
    %v1197 = vxor.u32 %v1193, 2147483648
    %v1198 = vxor.u32 %v1194, 2147483648
    %v1199 = vmul.f32 %v1195, 1.442695
    %v1200 = vpow.pop %v1199
    %v1201 = vmul.f32 %v1196, 1.442695
    %v1202 = vpow.pop %v1201
    %v1203 = vmul.f32 %v1197, 1.442695
    %v1204 = vpow.pop %v1203
    %v1205 = vmul.f32 %v1198, 1.442695
    %v1206 = vpow.pop %v1205
    %v1207 = vadd.f32 %v1200, 1.0
    %v1208 = vadd.f32 %v1202, 1.0
    %v1209 = vadd.f32 %v1204, 1.0
    %v1210 = vadd.f32 %v1206, 1.0
    %v1211 = vrcp.pop %v1207
    %v1212 = vmul.f32 1.0, %v1211
    %v1213 = vrcp.pop %v1208
    %v1214 = vmul.f32 1.0, %v1213
    %v1215 = vrcp.pop %v1209
    %v1216 = vmul.f32 1.0, %v1215
    %v1217 = vrcp.pop %v1210
    %v1218 = vmul.f32 1.0, %v1217
    %v1219 = vadd.f32 %v1058, %v1153
    %v1220 = vadd.f32 %v1059, %v1158
    %v1221 = vadd.f32 %v1060, %v1163
    %v1222 = vadd.f32 %v1061, %v1168
    %v1223 = vxor.u32 %v1219, 2147483648
    %v1224 = vxor.u32 %v1220, 2147483648
    %v1225 = vxor.u32 %v1221, 2147483648
    %v1226 = vxor.u32 %v1222, 2147483648
    %v1227 = vmul.f32 %v1223, 1.442695
    %v1228 = vpow.pop %v1227
    %v1229 = vmul.f32 %v1224, 1.442695
    %v1230 = vpow.pop %v1229
    %v1231 = vmul.f32 %v1225, 1.442695
    %v1232 = vpow.pop %v1231
    %v1233 = vmul.f32 %v1226, 1.442695
    %v1234 = vpow.pop %v1233
    %v1235 = vadd.f32 %v1228, 1.0
    %v1236 = vadd.f32 %v1230, 1.0
    %v1237 = vadd.f32 %v1232, 1.0
    %v1238 = vadd.f32 %v1234, 1.0
    %v1239 = vrcp.pop %v1235
    %v1240 = vmul.f32 1.0, %v1239
    %v1241 = vrcp.pop %v1236
    %v1242 = vmul.f32 1.0, %v1241
    %v1243 = vrcp.pop %v1237
    %v1244 = vmul.f32 1.0, %v1243
    %v1245 = vrcp.pop %v1238
    %v1246 = vmul.f32 1.0, %v1245
    %v1247 = vmul.f32 %v1212, %v1173
    %v1248 = vmul.f32 %v1214, %v1178
    %v1249 = vmul.f32 %v1216, %v1183
    %v1250 = vmul.f32 %v1218, %v1188
    %v1251 = vadd.f32 %v1062, %v1247
    %v1252 = vadd.f32 %v1063, %v1248
    %v1253 = vadd.f32 %v1064, %v1249
    %v1254 = vadd.f32 %v1065, %v1250
    %v1255 = vtanh.pop %v1251
    %v1256 = vtanh.pop %v1252
    %v1257 = vtanh.pop %v1253
    %v1258 = vtanh.pop %v1254
    %v1259 = vsub.f32 1.0, %v1240
    %v1260 = vsub.f32 1.0, %v1242
    %v1261 = vsub.f32 1.0, %v1244
    %v1262 = vsub.f32 1.0, %v1246
    %v1263 = vmul.f32 %v1259, %v1255
    %v1264 = vmul.f32 %v1260, %v1256
    %v1265 = vmul.f32 %v1261, %v1257
    %v1266 = vmul.f32 %v1262, %v1258
    %v1267 = vmul.f32 %v1240, %v1034
    %v1268 = vmul.f32 %v1242, %v1035
    %v1269 = vmul.f32 %v1244, %v1036
    %v1270 = vmul.f32 %v1246, %v1037
    %v1271 = vadd.f32 %v1263, %v1267
    %v1272 = vadd.f32 %v1264, %v1268
    %v1273 = vadd.f32 %v1265, %v1269
    %v1274 = vadd.f32 %v1266, %v1270
    %v1275 = vlaneseq
    %v1276 = vshrl.u32 %v1275, 7
    %v1277 = vsub.s32 4, %v1276
    %v1278 = vrot.slane %v109, %v1277
    %v1279 = vmul.f32 %v113, %v1278
    %v1280 = vmul.f32 %v118, %v1278
    %v1281 = vmul.f32 %v123, %v1278
    %v1282 = vmul.f32 %v128, %v1278
    %v1283 = vmul.f32 %v133, %v1278
    %v1284 = vmul.f32 %v138, %v1278
    %v1285 = vmul.f32 %v143, %v1278
    %v1286 = vmul.f32 %v148, %v1278
    %v1287 = vmul.f32 %v153, %v1278
    %v1288 = vmul.f32 %v158, %v1278
    %v1289 = vmul.f32 %v163, %v1278
    %v1290 = vmul.f32 %v168, %v1278
    %v1291 = vadd.f32 %v1279, %v189
    %v1292 = vadd.f32 %v1280, %v194
    %v1293 = vadd.f32 %v1281, %v199
    %v1294 = vadd.f32 %v1282, %v204
    %v1295 = vadd.f32 %v1283, %v209
    %v1296 = vadd.f32 %v1284, %v214
    %v1297 = vadd.f32 %v1285, %v219
    %v1298 = vadd.f32 %v1286, %v224
    %v1299 = vadd.f32 %v1287, %v229
    %v1300 = vadd.f32 %v1288, %v234
    %v1301 = vadd.f32 %v1289, %v239
    %v1302 = vadd.f32 %v1290, %v244
    %1303 = vmatprep.subr.mxu0 0.0
    %1304 = vmatpush1.msra.mxu0 0.0
    %1305 = vmatprep.subr.mxu0 0.0
    %1306 = vmatpush1.msra.mxu0 0.0
    %1307 = vmatprep.subr.mxu0 0.0
    %1308 = vmatpush1.msra.mxu0 0.0
    %1309 = vmatprep.subr.mxu0 0.0
    %1310 = vmatpush1.msra.mxu0 0.0
    %1311 = vmatprep.subr.mxu0 0.0
    %1312 = vmatpush1.msra.mxu0 0.0
    %1313 = vmatprep.subr.mxu0 0.0
    %1314 = vmatpush1.msra.mxu0 0.0
    %1315 = vmatprep.subr.mxu0 0.0
    %1316 = vmatpush1.msra.mxu0 0.0
    %1317 = vmatprep.subr.mxu0 0.0
    %1318 = vmatpush1.msra.mxu0 0.0
    %1319 = vmatprep.subr.mxu0 0.0
    %1320 = vmatpush1.msra.mxu0 0.0
    %1321 = vmatprep.subr.mxu0 0.0
    %1322 = vmatpush1.msra.mxu0 0.0
    %1323 = vmatprep.subr.mxu0 0.0
    %1324 = vmatpush1.msra.mxu0 0.0
    %1325 = vmatprep.subr.mxu0 0.0
    %1326 = vmatpush1.msra.mxu0 0.0
    %1327 = vmatprep.subr.mxu0 0.0
    %1328 = vmatpush1.msra.mxu0 %v1274
    %1329 = vmatprep.subr.mxu0 0.0
    %1330 = vmatpush1.msra.mxu0 %v1273
    %1331 = vmatprep.subr.mxu0 0.0
    %1332 = vmatpush1.msra.mxu0 %v1272
    %1333 = vmatprep.subr.mxu0 0.0
    %1334 = vmatpush1.msra.mxu0 %v1271
    %1335 = vmatprep.subr.mxu0 0.0
    %1336 = vmatpush2.msra.mxu0 0.0
    %1337 = vmatprep.subr.mxu0 0.0
    %1338 = vmatpush2.msra.mxu0 0.0
    %1339 = vmatprep.subr.mxu0 0.0
    %1340 = vmatpush2.msra.mxu0 0.0
    %1341 = vmatprep.subr.mxu0 0.0
    %1342 = vmatpush2.msra.mxu0 0.0
    %1343 = vmatprep.subr.mxu0 0.0
    %1344 = vmatpush2.msra.mxu0 0.0
    %1345 = vmatprep.subr.mxu0 0.0
    %1346 = vmatpush2.msra.mxu0 0.0
    %1347 = vmatprep.subr.mxu0 0.0
    %1348 = vmatpush2.msra.mxu0 0.0
    %1349 = vmatprep.subr.mxu0 0.0
    %1350 = vmatpush2.msra.mxu0 0.0
    %1351 = vmatprep.subr.mxu0 0.0
    %1352 = vmatpush2.msra.mxu0 0.0
    %1353 = vmatprep.subr.mxu0 0.0
    %1354 = vmatpush2.msra.mxu0 0.0
    %1355 = vmatprep.subr.mxu0 0.0
    %1356 = vmatpush2.msra.mxu0 0.0
    %1357 = vmatprep.subr.mxu0 0.0
    %1358 = vmatpush2.msra.mxu0 0.0
    %1359 = vmatprep.subr.mxu0 0.0
    %1360 = vmatpush2.msra.mxu0 0.0
    %1361 = vmatprep.subr.mxu0 0.0
    %1362 = vmatpush2.msra.mxu0 0.0
    %1363 = vmatprep.subr.mxu0 0.0
    %1364 = vmatpush2.msra.mxu0 0.0
    %1365 = vmatprep.subr.mxu0 0.0
    %1366 = vmatpush2.msra.mxu0 0.0
    %1367 = vmatprep.mubr.f32.mxu0 0.0
    %1368 = vmatmul.mubr.f32.gmra.mxu0 %v320
    %v1369 = vpop.f32.mrf.mxu0
    %v1370 = vadd.f32 %v261, %v1369
    %v1371 = vpop.f32.mrf.mxu0
    %1372 = vmatprep.mubr.f32.mxu0 0.0
    %1373 = vmatmul.mubr.f32.gmra.mxu0 %v323
    %v1374 = vpop.f32.mrf.mxu0
    %v1375 = vadd.f32 %v266, %v1374
    %v1376 = vpop.f32.mrf.mxu0
    %1377 = vmatprep.mubr.f32.mxu0 0.0
    %1378 = vmatmul.mubr.f32.gmra.mxu0 %v326
    %v1379 = vpop.f32.mrf.mxu0
    %v1380 = vadd.f32 %v271, %v1379
    %v1381 = vpop.f32.mrf.mxu0
    %1382 = vmatprep.mubr.f32.mxu0 0.0
    %1383 = vmatmul.mubr.f32.gmra.mxu0 %v329
    %v1384 = vpop.f32.mrf.mxu0
    %v1385 = vadd.f32 %v276, %v1384
    %v1386 = vpop.f32.mrf.mxu0
    %1387 = vmatprep.mubr.f32.mxu0 0.0
    %1388 = vmatmul.mubr.f32.gmra.mxu0 %v332
    %v1389 = vpop.f32.mrf.mxu0
    %v1390 = vadd.f32 %v281, %v1389
    %v1391 = vpop.f32.mrf.mxu0
    %1392 = vmatprep.mubr.f32.mxu0 0.0
    %1393 = vmatmul.mubr.f32.gmra.mxu0 %v335
    %v1394 = vpop.f32.mrf.mxu0
    %v1395 = vadd.f32 %v286, %v1394
    %v1396 = vpop.f32.mrf.mxu0
    %1397 = vmatprep.mubr.f32.mxu0 0.0
    %1398 = vmatmul.mubr.f32.gmra.mxu0 %v338
    %v1399 = vpop.f32.mrf.mxu0
    %v1400 = vadd.f32 %v291, %v1399
    %v1401 = vpop.f32.mrf.mxu0
    %1402 = vmatprep.mubr.f32.mxu0 0.0
    %1403 = vmatmul.mubr.f32.gmra.mxu0 %v341
    %v1404 = vpop.f32.mrf.mxu0
    %v1405 = vadd.f32 %v296, %v1404
    %v1406 = vpop.f32.mrf.mxu0
    %1407 = vmatprep.mubr.f32.mxu0 0.0
    %1408 = vmatmul.mubr.f32.gmra.mxu0 %v344
    %v1409 = vpop.f32.mrf.mxu0
    %v1410 = vadd.f32 %v301, %v1409
    %v1411 = vpop.f32.mrf.mxu0
    %1412 = vmatprep.mubr.f32.mxu0 0.0
    %1413 = vmatmul.mubr.f32.gmra.mxu0 %v347
    %v1414 = vpop.f32.mrf.mxu0
    %v1415 = vadd.f32 %v306, %v1414
    %v1416 = vpop.f32.mrf.mxu0
    %1417 = vmatprep.mubr.f32.mxu0 0.0
    %1418 = vmatmul.mubr.f32.gmra.mxu0 %v350
    %v1419 = vpop.f32.mrf.mxu0
    %v1420 = vadd.f32 %v311, %v1419
    %v1421 = vpop.f32.mrf.mxu0
    %1422 = vmatprep.mubr.f32.mxu0 0.0
    %1423 = vmatmul.mubr.f32.gmra.mxu0 %v353
    %v1424 = vpop.f32.mrf.mxu0
    %v1425 = vadd.f32 %v316, %v1424
    %v1426 = vpop.f32.mrf.mxu0
    %1427 = vdwg.mxu0
    %v1428 = vadd.f32 %v1291, %v1370
    %v1429 = vadd.f32 %v1292, %v1375
    %v1430 = vadd.f32 %v1293, %v1380
    %v1431 = vadd.f32 %v1294, %v1385
    %v1432 = vxor.u32 %v1428, 2147483648
    %v1433 = vxor.u32 %v1429, 2147483648
    %v1434 = vxor.u32 %v1430, 2147483648
    %v1435 = vxor.u32 %v1431, 2147483648
    %v1436 = vmul.f32 %v1432, 1.442695
    %v1437 = vpow.pop %v1436
    %v1438 = vmul.f32 %v1433, 1.442695
    %v1439 = vpow.pop %v1438
    %v1440 = vmul.f32 %v1434, 1.442695
    %v1441 = vpow.pop %v1440
    %v1442 = vmul.f32 %v1435, 1.442695
    %v1443 = vpow.pop %v1442
    %v1444 = vadd.f32 %v1437, 1.0
    %v1445 = vadd.f32 %v1439, 1.0
    %v1446 = vadd.f32 %v1441, 1.0
    %v1447 = vadd.f32 %v1443, 1.0
    %v1448 = vrcp.pop %v1444
    %v1449 = vmul.f32 1.0, %v1448
    %v1450 = vrcp.pop %v1445
    %v1451 = vmul.f32 1.0, %v1450
    %v1452 = vrcp.pop %v1446
    %v1453 = vmul.f32 1.0, %v1452
    %v1454 = vrcp.pop %v1447
    %v1455 = vmul.f32 1.0, %v1454
    %v1456 = vadd.f32 %v1295, %v1390
    %v1457 = vadd.f32 %v1296, %v1395
    %v1458 = vadd.f32 %v1297, %v1400
    %v1459 = vadd.f32 %v1298, %v1405
    %v1460 = vxor.u32 %v1456, 2147483648
    %v1461 = vxor.u32 %v1457, 2147483648
    %v1462 = vxor.u32 %v1458, 2147483648
    %v1463 = vxor.u32 %v1459, 2147483648
    %v1464 = vmul.f32 %v1460, 1.442695
    %v1465 = vpow.pop %v1464
    %v1466 = vmul.f32 %v1461, 1.442695
    %v1467 = vpow.pop %v1466
    %v1468 = vmul.f32 %v1462, 1.442695
    %v1469 = vpow.pop %v1468
    %v1470 = vmul.f32 %v1463, 1.442695
    %v1471 = vpow.pop %v1470
    %v1472 = vadd.f32 %v1465, 1.0
    %v1473 = vadd.f32 %v1467, 1.0
    %v1474 = vadd.f32 %v1469, 1.0
    %v1475 = vadd.f32 %v1471, 1.0
    %v1476 = vrcp.pop %v1472
    %v1477 = vmul.f32 1.0, %v1476
    %v1478 = vrcp.pop %v1473
    %v1479 = vmul.f32 1.0, %v1478
    %v1480 = vrcp.pop %v1474
    %v1481 = vmul.f32 1.0, %v1480
    %v1482 = vrcp.pop %v1475
    %v1483 = vmul.f32 1.0, %v1482
    %v1484 = vmul.f32 %v1449, %v1410
    %v1485 = vmul.f32 %v1451, %v1415
    %v1486 = vmul.f32 %v1453, %v1420
    %v1487 = vmul.f32 %v1455, %v1425
    %v1488 = vadd.f32 %v1299, %v1484
    %v1489 = vadd.f32 %v1300, %v1485
    %v1490 = vadd.f32 %v1301, %v1486
    %v1491 = vadd.f32 %v1302, %v1487
    %v1492 = vtanh.pop %v1488
    %v1493 = vtanh.pop %v1489
    %v1494 = vtanh.pop %v1490
    %v1495 = vtanh.pop %v1491
    %v1496 = vsub.f32 1.0, %v1477
    %v1497 = vsub.f32 1.0, %v1479
    %v1498 = vsub.f32 1.0, %v1481
    %v1499 = vsub.f32 1.0, %v1483
    %v1500 = vmul.f32 %v1496, %v1492
    %v1501 = vmul.f32 %v1497, %v1493
    %v1502 = vmul.f32 %v1498, %v1494
    %v1503 = vmul.f32 %v1499, %v1495
    %v1504 = vmul.f32 %v1477, %v1271
    %v1505 = vmul.f32 %v1479, %v1272
    %v1506 = vmul.f32 %v1481, %v1273
    %v1507 = vmul.f32 %v1483, %v1274
    %v1508 = vadd.f32 %v1500, %v1504
    %v1509 = vadd.f32 %v1501, %v1505
    %v1510 = vadd.f32 %v1502, %v1506
    %v1511 = vadd.f32 %v1503, %v1507
    %v1512 = vlaneseq
    %v1513 = vshrl.u32 %v1512, 7
    %v1514 = vsub.s32 5, %v1513
    %v1515 = vrot.slane %v109, %v1514
    %v1516 = vmul.f32 %v113, %v1515
    %v1517 = vmul.f32 %v118, %v1515
    %v1518 = vmul.f32 %v123, %v1515
    %v1519 = vmul.f32 %v128, %v1515
    %v1520 = vmul.f32 %v133, %v1515
    %v1521 = vmul.f32 %v138, %v1515
    %v1522 = vmul.f32 %v143, %v1515
    %v1523 = vmul.f32 %v148, %v1515
    %v1524 = vmul.f32 %v153, %v1515
    %v1525 = vmul.f32 %v158, %v1515
    %v1526 = vmul.f32 %v163, %v1515
    %v1527 = vmul.f32 %v168, %v1515
    %v1528 = vadd.f32 %v1516, %v189
    %v1529 = vadd.f32 %v1517, %v194
    %v1530 = vadd.f32 %v1518, %v199
    %v1531 = vadd.f32 %v1519, %v204
    %v1532 = vadd.f32 %v1520, %v209
    %v1533 = vadd.f32 %v1521, %v214
    %v1534 = vadd.f32 %v1522, %v219
    %v1535 = vadd.f32 %v1523, %v224
    %v1536 = vadd.f32 %v1524, %v229
    %v1537 = vadd.f32 %v1525, %v234
    %v1538 = vadd.f32 %v1526, %v239
    %v1539 = vadd.f32 %v1527, %v244
    %1540 = vmatprep.subr.mxu0 0.0
    %1541 = vmatpush1.msra.mxu0 0.0
    %1542 = vmatprep.subr.mxu0 0.0
    %1543 = vmatpush1.msra.mxu0 0.0
    %1544 = vmatprep.subr.mxu0 0.0
    %1545 = vmatpush1.msra.mxu0 0.0
    %1546 = vmatprep.subr.mxu0 0.0
    %1547 = vmatpush1.msra.mxu0 0.0
    %1548 = vmatprep.subr.mxu0 0.0
    %1549 = vmatpush1.msra.mxu0 0.0
    %1550 = vmatprep.subr.mxu0 0.0
    %1551 = vmatpush1.msra.mxu0 0.0
    %1552 = vmatprep.subr.mxu0 0.0
    %1553 = vmatpush1.msra.mxu0 0.0
    %1554 = vmatprep.subr.mxu0 0.0
    %1555 = vmatpush1.msra.mxu0 0.0
    %1556 = vmatprep.subr.mxu0 0.0
    %1557 = vmatpush1.msra.mxu0 0.0
    %1558 = vmatprep.subr.mxu0 0.0
    %1559 = vmatpush1.msra.mxu0 0.0
    %1560 = vmatprep.subr.mxu0 0.0
    %1561 = vmatpush1.msra.mxu0 0.0
    %1562 = vmatprep.subr.mxu0 0.0
    %1563 = vmatpush1.msra.mxu0 0.0
    %1564 = vmatprep.subr.mxu0 0.0
    %1565 = vmatpush1.msra.mxu0 %v1511
    %1566 = vmatprep.subr.mxu0 0.0
    %1567 = vmatpush1.msra.mxu0 %v1510
    %1568 = vmatprep.subr.mxu0 0.0
    %1569 = vmatpush1.msra.mxu0 %v1509
    %1570 = vmatprep.subr.mxu0 0.0
    %1571 = vmatpush1.msra.mxu0 %v1508
    %1572 = vmatprep.subr.mxu0 0.0
    %1573 = vmatpush2.msra.mxu0 0.0
    %1574 = vmatprep.subr.mxu0 0.0
    %1575 = vmatpush2.msra.mxu0 0.0
    %1576 = vmatprep.subr.mxu0 0.0
    %1577 = vmatpush2.msra.mxu0 0.0
    %1578 = vmatprep.subr.mxu0 0.0
    %1579 = vmatpush2.msra.mxu0 0.0
    %1580 = vmatprep.subr.mxu0 0.0
    %1581 = vmatpush2.msra.mxu0 0.0
    %1582 = vmatprep.subr.mxu0 0.0
    %1583 = vmatpush2.msra.mxu0 0.0
    %1584 = vmatprep.subr.mxu0 0.0
    %1585 = vmatpush2.msra.mxu0 0.0
    %1586 = vmatprep.subr.mxu0 0.0
    %1587 = vmatpush2.msra.mxu0 0.0
    %1588 = vmatprep.subr.mxu0 0.0
    %1589 = vmatpush2.msra.mxu0 0.0
    %1590 = vmatprep.subr.mxu0 0.0
    %1591 = vmatpush2.msra.mxu0 0.0
    %1592 = vmatprep.subr.mxu0 0.0
    %1593 = vmatpush2.msra.mxu0 0.0
    %1594 = vmatprep.subr.mxu0 0.0
    %1595 = vmatpush2.msra.mxu0 0.0
    %1596 = vmatprep.subr.mxu0 0.0
    %1597 = vmatpush2.msra.mxu0 0.0
    %1598 = vmatprep.subr.mxu0 0.0
    %1599 = vmatpush2.msra.mxu0 0.0
    %1600 = vmatprep.subr.mxu0 0.0
    %1601 = vmatpush2.msra.mxu0 0.0
    %1602 = vmatprep.subr.mxu0 0.0
    %1603 = vmatpush2.msra.mxu0 0.0
    %1604 = vmatprep.mubr.f32.mxu0 0.0
    %1605 = vmatmul.mubr.f32.gmra.mxu0 %v320
    %v1606 = vpop.f32.mrf.mxu0
    %v1607 = vadd.f32 %v261, %v1606
    %v1608 = vpop.f32.mrf.mxu0
    %1609 = vmatprep.mubr.f32.mxu0 0.0
    %1610 = vmatmul.mubr.f32.gmra.mxu0 %v323
    %v1611 = vpop.f32.mrf.mxu0
    %v1612 = vadd.f32 %v266, %v1611
    %v1613 = vpop.f32.mrf.mxu0
    %1614 = vmatprep.mubr.f32.mxu0 0.0
    %1615 = vmatmul.mubr.f32.gmra.mxu0 %v326
    %v1616 = vpop.f32.mrf.mxu0
    %v1617 = vadd.f32 %v271, %v1616
    %v1618 = vpop.f32.mrf.mxu0
    %1619 = vmatprep.mubr.f32.mxu0 0.0
    %1620 = vmatmul.mubr.f32.gmra.mxu0 %v329
    %v1621 = vpop.f32.mrf.mxu0
    %v1622 = vadd.f32 %v276, %v1621
    %v1623 = vpop.f32.mrf.mxu0
    %1624 = vmatprep.mubr.f32.mxu0 0.0
    %1625 = vmatmul.mubr.f32.gmra.mxu0 %v332
    %v1626 = vpop.f32.mrf.mxu0
    %v1627 = vadd.f32 %v281, %v1626
    %v1628 = vpop.f32.mrf.mxu0
    %1629 = vmatprep.mubr.f32.mxu0 0.0
    %1630 = vmatmul.mubr.f32.gmra.mxu0 %v335
    %v1631 = vpop.f32.mrf.mxu0
    %v1632 = vadd.f32 %v286, %v1631
    %v1633 = vpop.f32.mrf.mxu0
    %1634 = vmatprep.mubr.f32.mxu0 0.0
    %1635 = vmatmul.mubr.f32.gmra.mxu0 %v338
    %v1636 = vpop.f32.mrf.mxu0
    %v1637 = vadd.f32 %v291, %v1636
    %v1638 = vpop.f32.mrf.mxu0
    %1639 = vmatprep.mubr.f32.mxu0 0.0
    %1640 = vmatmul.mubr.f32.gmra.mxu0 %v341
    %v1641 = vpop.f32.mrf.mxu0
    %v1642 = vadd.f32 %v296, %v1641
    %v1643 = vpop.f32.mrf.mxu0
    %1644 = vmatprep.mubr.f32.mxu0 0.0
    %1645 = vmatmul.mubr.f32.gmra.mxu0 %v344
    %v1646 = vpop.f32.mrf.mxu0
    %v1647 = vadd.f32 %v301, %v1646
    %v1648 = vpop.f32.mrf.mxu0
    %1649 = vmatprep.mubr.f32.mxu0 0.0
    %1650 = vmatmul.mubr.f32.gmra.mxu0 %v347
    %v1651 = vpop.f32.mrf.mxu0
    %v1652 = vadd.f32 %v306, %v1651
    %v1653 = vpop.f32.mrf.mxu0
    %1654 = vmatprep.mubr.f32.mxu0 0.0
    %1655 = vmatmul.mubr.f32.gmra.mxu0 %v350
    %v1656 = vpop.f32.mrf.mxu0
    %v1657 = vadd.f32 %v311, %v1656
    %v1658 = vpop.f32.mrf.mxu0
    %1659 = vmatprep.mubr.f32.mxu0 0.0
    %1660 = vmatmul.mubr.f32.gmra.mxu0 %v353
    %v1661 = vpop.f32.mrf.mxu0
    %v1662 = vadd.f32 %v316, %v1661
    %v1663 = vpop.f32.mrf.mxu0
    %1664 = vdwg.mxu0
    %v1665 = vadd.f32 %v1528, %v1607
    %v1666 = vadd.f32 %v1529, %v1612
    %v1667 = vadd.f32 %v1530, %v1617
    %v1668 = vadd.f32 %v1531, %v1622
    %v1669 = vxor.u32 %v1665, 2147483648
    %v1670 = vxor.u32 %v1666, 2147483648
    %v1671 = vxor.u32 %v1667, 2147483648
    %v1672 = vxor.u32 %v1668, 2147483648
    %v1673 = vmul.f32 %v1669, 1.442695
    %v1674 = vpow.pop %v1673
    %v1675 = vmul.f32 %v1670, 1.442695
    %v1676 = vpow.pop %v1675
    %v1677 = vmul.f32 %v1671, 1.442695
    %v1678 = vpow.pop %v1677
    %v1679 = vmul.f32 %v1672, 1.442695
    %v1680 = vpow.pop %v1679
    %v1681 = vadd.f32 %v1674, 1.0
    %v1682 = vadd.f32 %v1676, 1.0
    %v1683 = vadd.f32 %v1678, 1.0
    %v1684 = vadd.f32 %v1680, 1.0
    %v1685 = vrcp.pop %v1681
    %v1686 = vmul.f32 1.0, %v1685
    %v1687 = vrcp.pop %v1682
    %v1688 = vmul.f32 1.0, %v1687
    %v1689 = vrcp.pop %v1683
    %v1690 = vmul.f32 1.0, %v1689
    %v1691 = vrcp.pop %v1684
    %v1692 = vmul.f32 1.0, %v1691
    %v1693 = vadd.f32 %v1532, %v1627
    %v1694 = vadd.f32 %v1533, %v1632
    %v1695 = vadd.f32 %v1534, %v1637
    %v1696 = vadd.f32 %v1535, %v1642
    %v1697 = vxor.u32 %v1693, 2147483648
    %v1698 = vxor.u32 %v1694, 2147483648
    %v1699 = vxor.u32 %v1695, 2147483648
    %v1700 = vxor.u32 %v1696, 2147483648
    %v1701 = vmul.f32 %v1697, 1.442695
    %v1702 = vpow.pop %v1701
    %v1703 = vmul.f32 %v1698, 1.442695
    %v1704 = vpow.pop %v1703
    %v1705 = vmul.f32 %v1699, 1.442695
    %v1706 = vpow.pop %v1705
    %v1707 = vmul.f32 %v1700, 1.442695
    %v1708 = vpow.pop %v1707
    %v1709 = vadd.f32 %v1702, 1.0
    %v1710 = vadd.f32 %v1704, 1.0
    %v1711 = vadd.f32 %v1706, 1.0
    %v1712 = vadd.f32 %v1708, 1.0
    %v1713 = vrcp.pop %v1709
    %v1714 = vmul.f32 1.0, %v1713
    %v1715 = vrcp.pop %v1710
    %v1716 = vmul.f32 1.0, %v1715
    %v1717 = vrcp.pop %v1711
    %v1718 = vmul.f32 1.0, %v1717
    %v1719 = vrcp.pop %v1712
    %v1720 = vmul.f32 1.0, %v1719
    %v1721 = vmul.f32 %v1686, %v1647
    %v1722 = vmul.f32 %v1688, %v1652
    %v1723 = vmul.f32 %v1690, %v1657
    %v1724 = vmul.f32 %v1692, %v1662
    %v1725 = vadd.f32 %v1536, %v1721
    %v1726 = vadd.f32 %v1537, %v1722
    %v1727 = vadd.f32 %v1538, %v1723
    %v1728 = vadd.f32 %v1539, %v1724
    %v1729 = vtanh.pop %v1725
    %v1730 = vtanh.pop %v1726
    %v1731 = vtanh.pop %v1727
    %v1732 = vtanh.pop %v1728
    %v1733 = vsub.f32 1.0, %v1714
    %v1734 = vsub.f32 1.0, %v1716
    %v1735 = vsub.f32 1.0, %v1718
    %v1736 = vsub.f32 1.0, %v1720
    %v1737 = vmul.f32 %v1733, %v1729
    %v1738 = vmul.f32 %v1734, %v1730
    %v1739 = vmul.f32 %v1735, %v1731
    %v1740 = vmul.f32 %v1736, %v1732
    %v1741 = vmul.f32 %v1714, %v1508
    %v1742 = vmul.f32 %v1716, %v1509
    %v1743 = vmul.f32 %v1718, %v1510
    %v1744 = vmul.f32 %v1720, %v1511
    %v1745 = vadd.f32 %v1737, %v1741
    %v1746 = vadd.f32 %v1738, %v1742
    %v1747 = vadd.f32 %v1739, %v1743
    %v1748 = vadd.f32 %v1740, %v1744
    %v1749 = vlaneseq
    %v1750 = vshrl.u32 %v1749, 7
    %v1751 = vsub.s32 6, %v1750
    %v1752 = vrot.slane %v109, %v1751
    %v1753 = vmul.f32 %v113, %v1752
    %v1754 = vmul.f32 %v118, %v1752
    %v1755 = vmul.f32 %v123, %v1752
    %v1756 = vmul.f32 %v128, %v1752
    %v1757 = vmul.f32 %v133, %v1752
    %v1758 = vmul.f32 %v138, %v1752
    %v1759 = vmul.f32 %v143, %v1752
    %v1760 = vmul.f32 %v148, %v1752
    %v1761 = vmul.f32 %v153, %v1752
    %v1762 = vmul.f32 %v158, %v1752
    %v1763 = vmul.f32 %v163, %v1752
    %v1764 = vmul.f32 %v168, %v1752
    %v1765 = vadd.f32 %v1753, %v189
    %v1766 = vadd.f32 %v1754, %v194
    %v1767 = vadd.f32 %v1755, %v199
    %v1768 = vadd.f32 %v1756, %v204
    %v1769 = vadd.f32 %v1757, %v209
    %v1770 = vadd.f32 %v1758, %v214
    %v1771 = vadd.f32 %v1759, %v219
    %v1772 = vadd.f32 %v1760, %v224
    %v1773 = vadd.f32 %v1761, %v229
    %v1774 = vadd.f32 %v1762, %v234
    %v1775 = vadd.f32 %v1763, %v239
    %v1776 = vadd.f32 %v1764, %v244
    %1777 = vmatprep.subr.mxu0 0.0
    %1778 = vmatpush1.msra.mxu0 0.0
    %1779 = vmatprep.subr.mxu0 0.0
    %1780 = vmatpush1.msra.mxu0 0.0
    %1781 = vmatprep.subr.mxu0 0.0
    %1782 = vmatpush1.msra.mxu0 0.0
    %1783 = vmatprep.subr.mxu0 0.0
    %1784 = vmatpush1.msra.mxu0 0.0
    %1785 = vmatprep.subr.mxu0 0.0
    %1786 = vmatpush1.msra.mxu0 0.0
    %1787 = vmatprep.subr.mxu0 0.0
    %1788 = vmatpush1.msra.mxu0 0.0
    %1789 = vmatprep.subr.mxu0 0.0
    %1790 = vmatpush1.msra.mxu0 0.0
    %1791 = vmatprep.subr.mxu0 0.0
    %1792 = vmatpush1.msra.mxu0 0.0
    %1793 = vmatprep.subr.mxu0 0.0
    %1794 = vmatpush1.msra.mxu0 0.0
    %1795 = vmatprep.subr.mxu0 0.0
    %1796 = vmatpush1.msra.mxu0 0.0
    %1797 = vmatprep.subr.mxu0 0.0
    %1798 = vmatpush1.msra.mxu0 0.0
    %1799 = vmatprep.subr.mxu0 0.0
    %1800 = vmatpush1.msra.mxu0 0.0
    %1801 = vmatprep.subr.mxu0 0.0
    %1802 = vmatpush1.msra.mxu0 %v1748
    %1803 = vmatprep.subr.mxu0 0.0
    %1804 = vmatpush1.msra.mxu0 %v1747
    %1805 = vmatprep.subr.mxu0 0.0
    %1806 = vmatpush1.msra.mxu0 %v1746
    %1807 = vmatprep.subr.mxu0 0.0
    %1808 = vmatpush1.msra.mxu0 %v1745
    %1809 = vmatprep.subr.mxu0 0.0
    %1810 = vmatpush2.msra.mxu0 0.0
    %1811 = vmatprep.subr.mxu0 0.0
    %1812 = vmatpush2.msra.mxu0 0.0
    %1813 = vmatprep.subr.mxu0 0.0
    %1814 = vmatpush2.msra.mxu0 0.0
    %1815 = vmatprep.subr.mxu0 0.0
    %1816 = vmatpush2.msra.mxu0 0.0
    %1817 = vmatprep.subr.mxu0 0.0
    %1818 = vmatpush2.msra.mxu0 0.0
    %1819 = vmatprep.subr.mxu0 0.0
    %1820 = vmatpush2.msra.mxu0 0.0
    %1821 = vmatprep.subr.mxu0 0.0
    %1822 = vmatpush2.msra.mxu0 0.0
    %1823 = vmatprep.subr.mxu0 0.0
    %1824 = vmatpush2.msra.mxu0 0.0
    %1825 = vmatprep.subr.mxu0 0.0
    %1826 = vmatpush2.msra.mxu0 0.0
    %1827 = vmatprep.subr.mxu0 0.0
    %1828 = vmatpush2.msra.mxu0 0.0
    %1829 = vmatprep.subr.mxu0 0.0
    %1830 = vmatpush2.msra.mxu0 0.0
    %1831 = vmatprep.subr.mxu0 0.0
    %1832 = vmatpush2.msra.mxu0 0.0
    %1833 = vmatprep.subr.mxu0 0.0
    %1834 = vmatpush2.msra.mxu0 0.0
    %1835 = vmatprep.subr.mxu0 0.0
    %1836 = vmatpush2.msra.mxu0 0.0
    %1837 = vmatprep.subr.mxu0 0.0
    %1838 = vmatpush2.msra.mxu0 0.0
    %1839 = vmatprep.subr.mxu0 0.0
    %1840 = vmatpush2.msra.mxu0 0.0
    %1841 = vmatprep.mubr.f32.mxu0 0.0
    %1842 = vmatmul.mubr.f32.gmra.mxu0 %v320
    %v1843 = vpop.f32.mrf.mxu0
    %v1844 = vadd.f32 %v261, %v1843
    %v1845 = vpop.f32.mrf.mxu0
    %1846 = vmatprep.mubr.f32.mxu0 0.0
    %1847 = vmatmul.mubr.f32.gmra.mxu0 %v323
    %v1848 = vpop.f32.mrf.mxu0
    %v1849 = vadd.f32 %v266, %v1848
    %v1850 = vpop.f32.mrf.mxu0
    %1851 = vmatprep.mubr.f32.mxu0 0.0
    %1852 = vmatmul.mubr.f32.gmra.mxu0 %v326
    %v1853 = vpop.f32.mrf.mxu0
    %v1854 = vadd.f32 %v271, %v1853
    %v1855 = vpop.f32.mrf.mxu0
    %1856 = vmatprep.mubr.f32.mxu0 0.0
    %1857 = vmatmul.mubr.f32.gmra.mxu0 %v329
    %v1858 = vpop.f32.mrf.mxu0
    %v1859 = vadd.f32 %v276, %v1858
    %v1860 = vpop.f32.mrf.mxu0
    %1861 = vmatprep.mubr.f32.mxu0 0.0
    %1862 = vmatmul.mubr.f32.gmra.mxu0 %v332
    %v1863 = vpop.f32.mrf.mxu0
    %v1864 = vadd.f32 %v281, %v1863
    %v1865 = vpop.f32.mrf.mxu0
    %1866 = vmatprep.mubr.f32.mxu0 0.0
    %1867 = vmatmul.mubr.f32.gmra.mxu0 %v335
    %v1868 = vpop.f32.mrf.mxu0
    %v1869 = vadd.f32 %v286, %v1868
    %v1870 = vpop.f32.mrf.mxu0
    %1871 = vmatprep.mubr.f32.mxu0 0.0
    %1872 = vmatmul.mubr.f32.gmra.mxu0 %v338
    %v1873 = vpop.f32.mrf.mxu0
    %v1874 = vadd.f32 %v291, %v1873
    %v1875 = vpop.f32.mrf.mxu0
    %1876 = vmatprep.mubr.f32.mxu0 0.0
    %1877 = vmatmul.mubr.f32.gmra.mxu0 %v341
    %v1878 = vpop.f32.mrf.mxu0
    %v1879 = vadd.f32 %v296, %v1878
    %v1880 = vpop.f32.mrf.mxu0
    %1881 = vmatprep.mubr.f32.mxu0 0.0
    %1882 = vmatmul.mubr.f32.gmra.mxu0 %v344
    %v1883 = vpop.f32.mrf.mxu0
    %v1884 = vadd.f32 %v301, %v1883
    %v1885 = vpop.f32.mrf.mxu0
    %1886 = vmatprep.mubr.f32.mxu0 0.0
    %1887 = vmatmul.mubr.f32.gmra.mxu0 %v347
    %v1888 = vpop.f32.mrf.mxu0
    %v1889 = vadd.f32 %v306, %v1888
    %v1890 = vpop.f32.mrf.mxu0
    %1891 = vmatprep.mubr.f32.mxu0 0.0
    %1892 = vmatmul.mubr.f32.gmra.mxu0 %v350
    %v1893 = vpop.f32.mrf.mxu0
    %v1894 = vadd.f32 %v311, %v1893
    %v1895 = vpop.f32.mrf.mxu0
    %1896 = vmatprep.mubr.f32.mxu0 0.0
    %1897 = vmatmul.mubr.f32.gmra.mxu0 %v353
    %v1898 = vpop.f32.mrf.mxu0
    %v1899 = vadd.f32 %v316, %v1898
    %v1900 = vpop.f32.mrf.mxu0
    %1901 = vdwg.mxu0
    %v1902 = vadd.f32 %v1765, %v1844
    %v1903 = vadd.f32 %v1766, %v1849
    %v1904 = vadd.f32 %v1767, %v1854
    %v1905 = vadd.f32 %v1768, %v1859
    %v1906 = vxor.u32 %v1902, 2147483648
    %v1907 = vxor.u32 %v1903, 2147483648
    %v1908 = vxor.u32 %v1904, 2147483648
    %v1909 = vxor.u32 %v1905, 2147483648
    %v1910 = vmul.f32 %v1906, 1.442695
    %v1911 = vpow.pop %v1910
    %v1912 = vmul.f32 %v1907, 1.442695
    %v1913 = vpow.pop %v1912
    %v1914 = vmul.f32 %v1908, 1.442695
    %v1915 = vpow.pop %v1914
    %v1916 = vmul.f32 %v1909, 1.442695
    %v1917 = vpow.pop %v1916
    %v1918 = vadd.f32 %v1911, 1.0
    %v1919 = vadd.f32 %v1913, 1.0
    %v1920 = vadd.f32 %v1915, 1.0
    %v1921 = vadd.f32 %v1917, 1.0
    %v1922 = vrcp.pop %v1918
    %v1923 = vmul.f32 1.0, %v1922
    %v1924 = vrcp.pop %v1919
    %v1925 = vmul.f32 1.0, %v1924
    %v1926 = vrcp.pop %v1920
    %v1927 = vmul.f32 1.0, %v1926
    %v1928 = vrcp.pop %v1921
    %v1929 = vmul.f32 1.0, %v1928
    %v1930 = vadd.f32 %v1769, %v1864
    %v1931 = vadd.f32 %v1770, %v1869
    %v1932 = vadd.f32 %v1771, %v1874
    %v1933 = vadd.f32 %v1772, %v1879
    %v1934 = vxor.u32 %v1930, 2147483648
    %v1935 = vxor.u32 %v1931, 2147483648
    %v1936 = vxor.u32 %v1932, 2147483648
    %v1937 = vxor.u32 %v1933, 2147483648
    %v1938 = vmul.f32 %v1934, 1.442695
    %v1939 = vpow.pop %v1938
    %v1940 = vmul.f32 %v1935, 1.442695
    %v1941 = vpow.pop %v1940
    %v1942 = vmul.f32 %v1936, 1.442695
    %v1943 = vpow.pop %v1942
    %v1944 = vmul.f32 %v1937, 1.442695
    %v1945 = vpow.pop %v1944
    %v1946 = vadd.f32 %v1939, 1.0
    %v1947 = vadd.f32 %v1941, 1.0
    %v1948 = vadd.f32 %v1943, 1.0
    %v1949 = vadd.f32 %v1945, 1.0
    %v1950 = vrcp.pop %v1946
    %v1951 = vmul.f32 1.0, %v1950
    %v1952 = vrcp.pop %v1947
    %v1953 = vmul.f32 1.0, %v1952
    %v1954 = vrcp.pop %v1948
    %v1955 = vmul.f32 1.0, %v1954
    %v1956 = vrcp.pop %v1949
    %v1957 = vmul.f32 1.0, %v1956
    %v1958 = vmul.f32 %v1923, %v1884
    %v1959 = vmul.f32 %v1925, %v1889
    %v1960 = vmul.f32 %v1927, %v1894
    %v1961 = vmul.f32 %v1929, %v1899
    %v1962 = vadd.f32 %v1773, %v1958
    %v1963 = vadd.f32 %v1774, %v1959
    %v1964 = vadd.f32 %v1775, %v1960
    %v1965 = vadd.f32 %v1776, %v1961
    %v1966 = vtanh.pop %v1962
    %v1967 = vtanh.pop %v1963
    %v1968 = vtanh.pop %v1964
    %v1969 = vtanh.pop %v1965
    %v1970 = vsub.f32 1.0, %v1951
    %v1971 = vsub.f32 1.0, %v1953
    %v1972 = vsub.f32 1.0, %v1955
    %v1973 = vsub.f32 1.0, %v1957
    %v1974 = vmul.f32 %v1970, %v1966
    %v1975 = vmul.f32 %v1971, %v1967
    %v1976 = vmul.f32 %v1972, %v1968
    %v1977 = vmul.f32 %v1973, %v1969
    %v1978 = vmul.f32 %v1951, %v1745
    %v1979 = vmul.f32 %v1953, %v1746
    %v1980 = vmul.f32 %v1955, %v1747
    %v1981 = vmul.f32 %v1957, %v1748
    %v1982 = vadd.f32 %v1974, %v1978
    %v1983 = vadd.f32 %v1975, %v1979
    %v1984 = vadd.f32 %v1976, %v1980
    %v1985 = vadd.f32 %v1977, %v1981
    %v1986 = vlaneseq
    %v1987 = vshrl.u32 %v1986, 7
    %v1988 = vsub.s32 7, %v1987
    %v1989 = vrot.slane %v109, %v1988
    %v1990 = vmul.f32 %v113, %v1989
    %v1991 = vmul.f32 %v118, %v1989
    %v1992 = vmul.f32 %v123, %v1989
    %v1993 = vmul.f32 %v128, %v1989
    %v1994 = vmul.f32 %v133, %v1989
    %v1995 = vmul.f32 %v138, %v1989
    %v1996 = vmul.f32 %v143, %v1989
    %v1997 = vmul.f32 %v148, %v1989
    %v1998 = vmul.f32 %v153, %v1989
    %v1999 = vmul.f32 %v158, %v1989
    %v2000 = vmul.f32 %v163, %v1989
    %v2001 = vmul.f32 %v168, %v1989
    %v2002 = vadd.f32 %v1990, %v189
    %v2003 = vadd.f32 %v1991, %v194
    %v2004 = vadd.f32 %v1992, %v199
    %v2005 = vadd.f32 %v1993, %v204
    %v2006 = vadd.f32 %v1994, %v209
    %v2007 = vadd.f32 %v1995, %v214
    %v2008 = vadd.f32 %v1996, %v219
    %v2009 = vadd.f32 %v1997, %v224
    %v2010 = vadd.f32 %v1998, %v229
    %v2011 = vadd.f32 %v1999, %v234
    %v2012 = vadd.f32 %v2000, %v239
    %v2013 = vadd.f32 %v2001, %v244
    %2014 = vmatprep.subr.mxu0 0.0
    %2015 = vmatpush1.msra.mxu0 0.0
    %2016 = vmatprep.subr.mxu0 0.0
    %2017 = vmatpush1.msra.mxu0 0.0
    %2018 = vmatprep.subr.mxu0 0.0
    %2019 = vmatpush1.msra.mxu0 0.0
    %2020 = vmatprep.subr.mxu0 0.0
    %2021 = vmatpush1.msra.mxu0 0.0
    %2022 = vmatprep.subr.mxu0 0.0
    %2023 = vmatpush1.msra.mxu0 0.0
    %2024 = vmatprep.subr.mxu0 0.0
    %2025 = vmatpush1.msra.mxu0 0.0
    %2026 = vmatprep.subr.mxu0 0.0
    %2027 = vmatpush1.msra.mxu0 0.0
    %2028 = vmatprep.subr.mxu0 0.0
    %2029 = vmatpush1.msra.mxu0 0.0
    %2030 = vmatprep.subr.mxu0 0.0
    %2031 = vmatpush1.msra.mxu0 0.0
    %2032 = vmatprep.subr.mxu0 0.0
    %2033 = vmatpush1.msra.mxu0 0.0
    %2034 = vmatprep.subr.mxu0 0.0
    %2035 = vmatpush1.msra.mxu0 0.0
    %2036 = vmatprep.subr.mxu0 0.0
    %2037 = vmatpush1.msra.mxu0 0.0
    %2038 = vmatprep.subr.mxu0 0.0
    %2039 = vmatpush1.msra.mxu0 %v1985
    %2040 = vmatprep.subr.mxu0 0.0
    %2041 = vmatpush1.msra.mxu0 %v1984
    %2042 = vmatprep.subr.mxu0 0.0
    %2043 = vmatpush1.msra.mxu0 %v1983
    %2044 = vmatprep.subr.mxu0 0.0
    %2045 = vmatpush1.msra.mxu0 %v1982
    %2046 = vmatprep.subr.mxu0 0.0
    %2047 = vmatpush2.msra.mxu0 0.0
    %2048 = vmatprep.subr.mxu0 0.0
    %2049 = vmatpush2.msra.mxu0 0.0
    %2050 = vmatprep.subr.mxu0 0.0
    %2051 = vmatpush2.msra.mxu0 0.0
    %2052 = vmatprep.subr.mxu0 0.0
    %2053 = vmatpush2.msra.mxu0 0.0
    %2054 = vmatprep.subr.mxu0 0.0
    %2055 = vmatpush2.msra.mxu0 0.0
    %2056 = vmatprep.subr.mxu0 0.0
    %2057 = vmatpush2.msra.mxu0 0.0
    %2058 = vmatprep.subr.mxu0 0.0
    %2059 = vmatpush2.msra.mxu0 0.0
    %2060 = vmatprep.subr.mxu0 0.0
    %2061 = vmatpush2.msra.mxu0 0.0
    %2062 = vmatprep.subr.mxu0 0.0
    %2063 = vmatpush2.msra.mxu0 0.0
    %2064 = vmatprep.subr.mxu0 0.0
    %2065 = vmatpush2.msra.mxu0 0.0
    %2066 = vmatprep.subr.mxu0 0.0
    %2067 = vmatpush2.msra.mxu0 0.0
    %2068 = vmatprep.subr.mxu0 0.0
    %2069 = vmatpush2.msra.mxu0 0.0
    %2070 = vmatprep.subr.mxu0 0.0
    %2071 = vmatpush2.msra.mxu0 0.0
    %2072 = vmatprep.subr.mxu0 0.0
    %2073 = vmatpush2.msra.mxu0 0.0
    %2074 = vmatprep.subr.mxu0 0.0
    %2075 = vmatpush2.msra.mxu0 0.0
    %2076 = vmatprep.subr.mxu0 0.0
    %2077 = vmatpush2.msra.mxu0 0.0
    %2078 = vmatprep.mubr.f32.mxu0 0.0
    %2079 = vmatmul.mubr.f32.gmra.mxu0 %v320
    %v2080 = vpop.f32.mrf.mxu0
    %v2081 = vadd.f32 %v261, %v2080
    %v2082 = vpop.f32.mrf.mxu0
    %2083 = vmatprep.mubr.f32.mxu0 0.0
    %2084 = vmatmul.mubr.f32.gmra.mxu0 %v323
    %v2085 = vpop.f32.mrf.mxu0
    %v2086 = vadd.f32 %v266, %v2085
    %v2087 = vpop.f32.mrf.mxu0
    %2088 = vmatprep.mubr.f32.mxu0 0.0
    %2089 = vmatmul.mubr.f32.gmra.mxu0 %v326
    %v2090 = vpop.f32.mrf.mxu0
    %v2091 = vadd.f32 %v271, %v2090
    %v2092 = vpop.f32.mrf.mxu0
    %2093 = vmatprep.mubr.f32.mxu0 0.0
    %2094 = vmatmul.mubr.f32.gmra.mxu0 %v329
    %v2095 = vpop.f32.mrf.mxu0
    %v2096 = vadd.f32 %v276, %v2095
    %v2097 = vpop.f32.mrf.mxu0
    %2098 = vmatprep.mubr.f32.mxu0 0.0
    %2099 = vmatmul.mubr.f32.gmra.mxu0 %v332
    %v2100 = vpop.f32.mrf.mxu0
    %v2101 = vadd.f32 %v281, %v2100
    %v2102 = vpop.f32.mrf.mxu0
    %2103 = vmatprep.mubr.f32.mxu0 0.0
    %2104 = vmatmul.mubr.f32.gmra.mxu0 %v335
    %v2105 = vpop.f32.mrf.mxu0
    %v2106 = vadd.f32 %v286, %v2105
    %v2107 = vpop.f32.mrf.mxu0
    %2108 = vmatprep.mubr.f32.mxu0 0.0
    %2109 = vmatmul.mubr.f32.gmra.mxu0 %v338
    %v2110 = vpop.f32.mrf.mxu0
    %v2111 = vadd.f32 %v291, %v2110
    %v2112 = vpop.f32.mrf.mxu0
    %2113 = vmatprep.mubr.f32.mxu0 0.0
    %2114 = vmatmul.mubr.f32.gmra.mxu0 %v341
    %v2115 = vpop.f32.mrf.mxu0
    %v2116 = vadd.f32 %v296, %v2115
    %v2117 = vpop.f32.mrf.mxu0
    %2118 = vmatprep.mubr.f32.mxu0 0.0
    %2119 = vmatmul.mubr.f32.gmra.mxu0 %v344
    %v2120 = vpop.f32.mrf.mxu0
    %v2121 = vadd.f32 %v301, %v2120
    %v2122 = vpop.f32.mrf.mxu0
    %2123 = vmatprep.mubr.f32.mxu0 0.0
    %2124 = vmatmul.mubr.f32.gmra.mxu0 %v347
    %v2125 = vpop.f32.mrf.mxu0
    %v2126 = vadd.f32 %v306, %v2125
    %v2127 = vpop.f32.mrf.mxu0
    %2128 = vmatprep.mubr.f32.mxu0 0.0
    %2129 = vmatmul.mubr.f32.gmra.mxu0 %v350
    %v2130 = vpop.f32.mrf.mxu0
    %v2131 = vadd.f32 %v311, %v2130
    %v2132 = vpop.f32.mrf.mxu0
    %2133 = vmatprep.mubr.f32.mxu0 0.0
    %2134 = vmatmul.mubr.f32.gmra.mxu0 %v353
    %v2135 = vpop.f32.mrf.mxu0
    %v2136 = vadd.f32 %v316, %v2135
    %v2137 = vpop.f32.mrf.mxu0
    %2138 = vdwg.mxu0
    %v2139 = vadd.f32 %v2002, %v2081
    %v2140 = vadd.f32 %v2003, %v2086
    %v2141 = vadd.f32 %v2004, %v2091
    %v2142 = vadd.f32 %v2005, %v2096
    %v2143 = vxor.u32 %v2139, 2147483648
    %v2144 = vxor.u32 %v2140, 2147483648
    %v2145 = vxor.u32 %v2141, 2147483648
    %v2146 = vxor.u32 %v2142, 2147483648
    %v2147 = vmul.f32 %v2143, 1.442695
    %v2148 = vpow.pop %v2147
    %v2149 = vmul.f32 %v2144, 1.442695
    %v2150 = vpow.pop %v2149
    %v2151 = vmul.f32 %v2145, 1.442695
    %v2152 = vpow.pop %v2151
    %v2153 = vmul.f32 %v2146, 1.442695
    %v2154 = vpow.pop %v2153
    %v2155 = vadd.f32 %v2148, 1.0
    %v2156 = vadd.f32 %v2150, 1.0
    %v2157 = vadd.f32 %v2152, 1.0
    %v2158 = vadd.f32 %v2154, 1.0
    %v2159 = vrcp.pop %v2155
    %v2160 = vmul.f32 1.0, %v2159
    %v2161 = vrcp.pop %v2156
    %v2162 = vmul.f32 1.0, %v2161
    %v2163 = vrcp.pop %v2157
    %v2164 = vmul.f32 1.0, %v2163
    %v2165 = vrcp.pop %v2158
    %v2166 = vmul.f32 1.0, %v2165
    %v2167 = vadd.f32 %v2006, %v2101
    %v2168 = vadd.f32 %v2007, %v2106
    %v2169 = vadd.f32 %v2008, %v2111
    %v2170 = vadd.f32 %v2009, %v2116
    %v2171 = vxor.u32 %v2167, 2147483648
    %v2172 = vxor.u32 %v2168, 2147483648
    %v2173 = vxor.u32 %v2169, 2147483648
    %v2174 = vxor.u32 %v2170, 2147483648
    %v2175 = vmul.f32 %v2171, 1.442695
    %v2176 = vpow.pop %v2175
    %v2177 = vmul.f32 %v2172, 1.442695
    %v2178 = vpow.pop %v2177
    %v2179 = vmul.f32 %v2173, 1.442695
    %v2180 = vpow.pop %v2179
    %v2181 = vmul.f32 %v2174, 1.442695
    %v2182 = vpow.pop %v2181
    %v2183 = vadd.f32 %v2176, 1.0
    %v2184 = vadd.f32 %v2178, 1.0
    %v2185 = vadd.f32 %v2180, 1.0
    %v2186 = vadd.f32 %v2182, 1.0
    %v2187 = vrcp.pop %v2183
    %v2188 = vmul.f32 1.0, %v2187
    %v2189 = vrcp.pop %v2184
    %v2190 = vmul.f32 1.0, %v2189
    %v2191 = vrcp.pop %v2185
    %v2192 = vmul.f32 1.0, %v2191
    %v2193 = vrcp.pop %v2186
    %v2194 = vmul.f32 1.0, %v2193
    %v2195 = vmul.f32 %v2160, %v2121
    %v2196 = vmul.f32 %v2162, %v2126
    %v2197 = vmul.f32 %v2164, %v2131
    %v2198 = vmul.f32 %v2166, %v2136
    %v2199 = vadd.f32 %v2010, %v2195
    %v2200 = vadd.f32 %v2011, %v2196
    %v2201 = vadd.f32 %v2012, %v2197
    %v2202 = vadd.f32 %v2013, %v2198
    %v2203 = vtanh.pop %v2199
    %v2204 = vtanh.pop %v2200
    %v2205 = vtanh.pop %v2201
    %v2206 = vtanh.pop %v2202
    %v2207 = vsub.f32 1.0, %v2188
    %v2208 = vsub.f32 1.0, %v2190
    %v2209 = vsub.f32 1.0, %v2192
    %v2210 = vsub.f32 1.0, %v2194
    %v2211 = vmul.f32 %v2207, %v2203
    %v2212 = vmul.f32 %v2208, %v2204
    %v2213 = vmul.f32 %v2209, %v2205
    %v2214 = vmul.f32 %v2210, %v2206
    %v2215 = vmul.f32 %v2188, %v1982
    %v2216 = vmul.f32 %v2190, %v1983
    %v2217 = vmul.f32 %v2192, %v1984
    %v2218 = vmul.f32 %v2194, %v1985
    %v2219 = vadd.f32 %v2211, %v2215
    %v2220 = vadd.f32 %v2212, %v2216
    %v2221 = vadd.f32 %v2213, %v2217
    %v2222 = vadd.f32 %v2214, %v2218
    %v2223 = vld [vmem:[%s2] sm:$0xff]
    %v2224 = vld [vmem:[%s2 + $0x8] sm:$0xff]
    %v2225 = vld [vmem:[%s2 + $0x10] sm:$0xff]
    %v2226 = vld [vmem:[%s2 + $0x18] sm:$0xff]
    %v2227 = vld [vmem:[%s7] sm:$0xff]
    %v2228 = vld [vmem:[%s7 + $0x8] sm:$0xff]
    %v2229 = vld [vmem:[%s7 + $0x10] sm:$0xff]
    %v2230 = vld [vmem:[%s7 + $0x18] sm:$0xff]
    %v2231 = vld [vmem:[%s7 + $0x20] sm:$0xff]
    %v2232 = vld [vmem:[%s7 + $0x28] sm:$0xff]
    %v2233 = vld [vmem:[%s7 + $0x30] sm:$0xff]
    %v2234 = vld [vmem:[%s7 + $0x38] sm:$0xff]
    %v2235 = vld [vmem:[%s8] sm:$0xff]
    %v2236 = vld [vmem:[%s8 + $0x8] sm:$0xff]
    %v2237 = vld [vmem:[%s8 + $0x10] sm:$0xff]
    %v2238 = vld [vmem:[%s8 + $0x18] sm:$0xff]
    %v2239 = vld [vmem:[%s8 + $0x20] sm:$0xff]
    %v2240 = vld [vmem:[%s8 + $0x28] sm:$0xff]
    %v2241 = vld [vmem:[%s8 + $0x30] sm:$0xff]
    %v2242 = vld [vmem:[%s8 + $0x38] sm:$0xff]
    %2244 = vset.pattern.permute.xlu0 0
    %2245 = vperm.xlu0 %2244, %v2235
    %v2246 = vpop.permute.xlu0 %2245
    %2249 = vset.pattern.permute.xlu0 0
    %2250 = vperm.xlu0 %2249, %v2236
    %v2251 = vpop.permute.xlu0 %2250
    %2254 = vset.pattern.permute.xlu0 0
    %2255 = vperm.xlu0 %2254, %v2237
    %v2256 = vpop.permute.xlu0 %2255
    %2259 = vset.pattern.permute.xlu0 0
    %2260 = vperm.xlu0 %2259, %v2238
    %v2261 = vpop.permute.xlu0 %2260
    %2264 = vset.pattern.permute.xlu0 0
    %2265 = vperm.xlu0 %2264, %v2239
    %v2266 = vpop.permute.xlu0 %2265
    %2269 = vset.pattern.permute.xlu0 0
    %2270 = vperm.xlu0 %2269, %v2240
    %v2271 = vpop.permute.xlu0 %2270
    %2274 = vset.pattern.permute.xlu0 0
    %2275 = vperm.xlu0 %2274, %v2241
    %v2276 = vpop.permute.xlu0 %2275
    %2279 = vset.pattern.permute.xlu0 0
    %2280 = vperm.xlu0 %2279, %v2242
    %v2281 = vpop.permute.xlu0 %2280
    %vm2283 = vcmask 523264
    %v2285 = vsel %vm2283, %v2227, 0
    %v2288 = vsel %vm2283, %v2228, 0
    %v2291 = vsel %vm2283, %v2229, 0
    %v2294 = vsel %vm2283, %v2230, 0
    %v2297 = vsel %vm2283, %v2231, 0
    %v2300 = vsel %vm2283, %v2232, 0
    %v2303 = vsel %vm2283, %v2233, 0
    %v2306 = vsel %vm2283, %v2234, 0
    %2308 = vmatprep.subr.mxu0 0.0
    %2309 = vmatpush1.msra.mxu0 0.0
    %2310 = vmatprep.subr.mxu0 0.0
    %2311 = vmatpush1.msra.mxu0 0.0
    %2312 = vmatprep.subr.mxu0 0.0
    %2313 = vmatpush1.msra.mxu0 0.0
    %2314 = vmatprep.subr.mxu0 0.0
    %2315 = vmatpush1.msra.mxu0 0.0
    %2316 = vmatprep.subr.mxu0 0.0
    %2317 = vmatpush1.msra.mxu0 0.0
    %2318 = vmatprep.subr.mxu0 0.0
    %2319 = vmatpush1.msra.mxu0 0.0
    %2320 = vmatprep.subr.mxu0 0.0
    %2321 = vmatpush1.msra.mxu0 0.0
    %2322 = vmatprep.subr.mxu0 0.0
    %2323 = vmatpush1.msra.mxu0 0.0
    %2324 = vmatprep.subr.mxu0 0.0
    %2325 = vmatpush1.msra.mxu0 %v2226
    %2326 = vmatprep.subr.mxu0 0.0
    %2327 = vmatpush1.msra.mxu0 %v2225
    %2328 = vmatprep.subr.mxu0 0.0
    %2329 = vmatpush1.msra.mxu0 %v2224
    %2330 = vmatprep.subr.mxu0 0.0
    %2331 = vmatpush1.msra.mxu0 %v2223
    %2332 = vmatprep.subr.mxu0 0.0
    %2333 = vmatpush1.msra.mxu0 %v2222
    %2334 = vmatprep.subr.mxu0 0.0
    %2335 = vmatpush1.msra.mxu0 %v2221
    %2336 = vmatprep.subr.mxu0 0.0
    %2337 = vmatpush1.msra.mxu0 %v2220
    %2338 = vmatprep.subr.mxu0 0.0
    %2339 = vmatpush1.msra.mxu0 %v2219
    %2340 = vmatprep.subr.mxu0 0.0
    %2341 = vmatpush2.msra.mxu0 0.0
    %2342 = vmatprep.subr.mxu0 0.0
    %2343 = vmatpush2.msra.mxu0 0.0
    %2344 = vmatprep.subr.mxu0 0.0
    %2345 = vmatpush2.msra.mxu0 0.0
    %2346 = vmatprep.subr.mxu0 0.0
    %2347 = vmatpush2.msra.mxu0 0.0
    %2348 = vmatprep.subr.mxu0 0.0
    %2349 = vmatpush2.msra.mxu0 0.0
    %2350 = vmatprep.subr.mxu0 0.0
    %2351 = vmatpush2.msra.mxu0 0.0
    %2352 = vmatprep.subr.mxu0 0.0
    %2353 = vmatpush2.msra.mxu0 0.0
    %2354 = vmatprep.subr.mxu0 0.0
    %2355 = vmatpush2.msra.mxu0 0.0
    %2356 = vmatprep.subr.mxu0 0.0
    %2357 = vmatpush2.msra.mxu0 0.0
    %2358 = vmatprep.subr.mxu0 0.0
    %2359 = vmatpush2.msra.mxu0 0.0
    %2360 = vmatprep.subr.mxu0 0.0
    %2361 = vmatpush2.msra.mxu0 0.0
    %2362 = vmatprep.subr.mxu0 0.0
    %2363 = vmatpush2.msra.mxu0 0.0
    %2364 = vmatprep.subr.mxu0 0.0
    %2365 = vmatpush2.msra.mxu0 0.0
    %2366 = vmatprep.subr.mxu0 0.0
    %2367 = vmatpush2.msra.mxu0 0.0
    %2368 = vmatprep.subr.mxu0 0.0
    %2369 = vmatpush2.msra.mxu0 0.0
    %2370 = vmatprep.subr.mxu0 0.0
    %2371 = vmatpush2.msra.mxu0 0.0
    %2372 = vmatprep.mubr.f32.mxu0 0.0
    %2373 = vmatmul.mubr.f32.gmra.mxu0 %v2285
    %v2374 = vpop.f32.mrf.mxu0
    %v2375 = vadd.f32 %v2246, %v2374
    %v2376 = vpop.f32.mrf.mxu0
    %2377 = vmatprep.mubr.f32.mxu0 0.0
    %2378 = vmatmul.mubr.f32.gmra.mxu0 %v2288
    %v2379 = vpop.f32.mrf.mxu0
    %v2380 = vadd.f32 %v2251, %v2379
    %v2381 = vpop.f32.mrf.mxu0
    %2382 = vmatprep.mubr.f32.mxu0 0.0
    %2383 = vmatmul.mubr.f32.gmra.mxu0 %v2291
    %v2384 = vpop.f32.mrf.mxu0
    %v2385 = vadd.f32 %v2256, %v2384
    %v2386 = vpop.f32.mrf.mxu0
    %2387 = vmatprep.mubr.f32.mxu0 0.0
    %2388 = vmatmul.mubr.f32.gmra.mxu0 %v2294
    %v2389 = vpop.f32.mrf.mxu0
    %v2390 = vadd.f32 %v2261, %v2389
    %v2391 = vpop.f32.mrf.mxu0
    %2392 = vmatprep.mubr.f32.mxu0 0.0
    %2393 = vmatmul.mubr.f32.gmra.mxu0 %v2297
    %v2394 = vpop.f32.mrf.mxu0
    %v2395 = vadd.f32 %v2266, %v2394
    %v2396 = vpop.f32.mrf.mxu0
    %2397 = vmatprep.mubr.f32.mxu0 0.0
    %2398 = vmatmul.mubr.f32.gmra.mxu0 %v2300
    %v2399 = vpop.f32.mrf.mxu0
    %v2400 = vadd.f32 %v2271, %v2399
    %v2401 = vpop.f32.mrf.mxu0
    %2402 = vmatprep.mubr.f32.mxu0 0.0
    %2403 = vmatmul.mubr.f32.gmra.mxu0 %v2303
    %v2404 = vpop.f32.mrf.mxu0
    %v2405 = vadd.f32 %v2276, %v2404
    %v2406 = vpop.f32.mrf.mxu0
    %2407 = vmatprep.mubr.f32.mxu0 0.0
    %2408 = vmatmul.mubr.f32.gmra.mxu0 %v2306
    %v2409 = vpop.f32.mrf.mxu0
    %v2410 = vadd.f32 %v2281, %v2409
    %v2411 = vpop.f32.mrf.mxu0
    %2412 = vdwg.mxu0
    %v2413 = vmax.f32 %v2375, 0.0
    %v2414 = vmax.f32 %v2380, 0.0
    %v2415 = vmax.f32 %v2385, 0.0
    %v2416 = vmax.f32 %v2390, 0.0
    %v2417 = vmax.f32 %v2395, 0.0
    %v2418 = vmax.f32 %v2400, 0.0
    %v2419 = vmax.f32 %v2405, 0.0
    %v2420 = vmax.f32 %v2410, 0.0
    %v2421 = vld [vmem:[%s9] sm:$0x1]
    %v2422 = vld [vmem:[#allocation2] sm:$0x1]
    %2424 = vset.pattern.permute.xlu0 0
    %2425 = vperm.xlu0 %2424, %v2422
    %v2426 = vpop.permute.xlu0 %2425
    %v2428 = vlaneseq
    %v2429 = vshrl.u32 %v2428, 7
    %v2430 = vsub.s32 0, %v2429
    %v2431 = vrot.slane %v2426, %v2430
    %v2433 = vsel %vm2283, %v2421, 0
    %2435 = vmatprep.subr.mxu0 0.0
    %2436 = vmatpush1.msra.mxu0 0.0
    %2437 = vmatprep.subr.mxu0 0.0
    %2438 = vmatpush1.msra.mxu0 0.0
    %2439 = vmatprep.subr.mxu0 0.0
    %2440 = vmatpush1.msra.mxu0 0.0
    %2441 = vmatprep.subr.mxu0 0.0
    %2442 = vmatpush1.msra.mxu0 0.0
    %2443 = vmatprep.subr.mxu0 0.0
    %2444 = vmatpush1.msra.mxu0 0.0
    %2445 = vmatprep.subr.mxu0 0.0
    %2446 = vmatpush1.msra.mxu0 0.0
    %2447 = vmatprep.subr.mxu0 0.0
    %2448 = vmatpush1.msra.mxu0 0.0
    %2449 = vmatprep.subr.mxu0 0.0
    %2450 = vmatpush1.msra.mxu0 0.0
    %2451 = vmatprep.subr.mxu0 0.0
    %2452 = vmatpush1.msra.mxu0 %v2420
    %2453 = vmatprep.subr.mxu0 0.0
    %2454 = vmatpush1.msra.mxu0 %v2419
    %2455 = vmatprep.subr.mxu0 0.0
    %2456 = vmatpush1.msra.mxu0 %v2418
    %2457 = vmatprep.subr.mxu0 0.0
    %2458 = vmatpush1.msra.mxu0 %v2417
    %2459 = vmatprep.subr.mxu0 0.0
    %2460 = vmatpush1.msra.mxu0 %v2416
    %2461 = vmatprep.subr.mxu0 0.0
    %2462 = vmatpush1.msra.mxu0 %v2415
    %2463 = vmatprep.subr.mxu0 0.0
    %2464 = vmatpush1.msra.mxu0 %v2414
    %2465 = vmatprep.subr.mxu0 0.0
    %2466 = vmatpush1.msra.mxu0 %v2413
    %2467 = vmatprep.subr.mxu0 0.0
    %2468 = vmatpush2.msra.mxu0 0.0
    %2469 = vmatprep.subr.mxu0 0.0
    %2470 = vmatpush2.msra.mxu0 0.0
    %2471 = vmatprep.subr.mxu0 0.0
    %2472 = vmatpush2.msra.mxu0 0.0
    %2473 = vmatprep.subr.mxu0 0.0
    %2474 = vmatpush2.msra.mxu0 0.0
    %2475 = vmatprep.subr.mxu0 0.0
    %2476 = vmatpush2.msra.mxu0 0.0
    %2477 = vmatprep.subr.mxu0 0.0
    %2478 = vmatpush2.msra.mxu0 0.0
    %2479 = vmatprep.subr.mxu0 0.0
    %2480 = vmatpush2.msra.mxu0 0.0
    %2481 = vmatprep.subr.mxu0 0.0
    %2482 = vmatpush2.msra.mxu0 0.0
    %2483 = vmatprep.subr.mxu0 0.0
    %2484 = vmatpush2.msra.mxu0 0.0
    %2485 = vmatprep.subr.mxu0 0.0
    %2486 = vmatpush2.msra.mxu0 0.0
    %2487 = vmatprep.subr.mxu0 0.0
    %2488 = vmatpush2.msra.mxu0 0.0
    %2489 = vmatprep.subr.mxu0 0.0
    %2490 = vmatpush2.msra.mxu0 0.0
    %2491 = vmatprep.subr.mxu0 0.0
    %2492 = vmatpush2.msra.mxu0 0.0
    %2493 = vmatprep.subr.mxu0 0.0
    %2494 = vmatpush2.msra.mxu0 0.0
    %2495 = vmatprep.subr.mxu0 0.0
    %2496 = vmatpush2.msra.mxu0 0.0
    %2497 = vmatprep.subr.mxu0 0.0
    %2498 = vmatpush2.msra.mxu0 0.0
    %2499 = vmatprep.mubr.f32.mxu0 0.0
    %2500 = vmatmul.mubr.f32.gmra.mxu0 %v2433
    %v2501 = vpop.f32.mrf.mxu0
    %v2502 = vadd.f32 %v2431, %v2501
    %v2503 = vpop.f32.mrf.mxu0
    %2504 = vdwg.mxu0
    %v2505 = vstv %s55
    %v2506 = vmul.f32 %v2502, %v2505
    %v2507 = vadd.f32 %v2506, %v106
    %2508 = vst [vmem:[#allocation6] sm:$0x1] %v2507
    // Predicated region
    $region50: #{tpu_custom_call.1} parent=1 // pred_check
      _
    $region51: #{tpu_custom_call.1} parent=1 // pred_check_branch
      %2510 = sbr.rel (0) target = $region53
    $region52: #{tpu_custom_call.1} parent=1 // pred_region
      %s2512 = ssub.s32 16, 16
      %2513 = vsyncadd [#allocation4], %s2512
      %s2515 = sshll.u32 [#allocation6], 4
      %s2516 = int_to_ptr.vmem [resolvable:$true] %s2515
      %2518 = dma.vmem_to_hbm [thread:$0]  %s2516, 16, %s11, [#allocation4]
    $region53: #{tpu_custom_call.1} parent=1 // pred_fallthru
      _
    // Predicated region
    $region54: #{tpu_custom_call.1} parent=1 // pred_check
      _
    $region55: #{tpu_custom_call.1} parent=1 // pred_check_branch
      %2520 = sbr.rel (0) target = $region57
    $region56: #{tpu_custom_call.1} parent=1 // pred_region
      %2521 = dma.done [#allocation4], 16
    $region57: #{tpu_custom_call.1} parent=1 // pred_fallthru
      _
    %2522 = vsyncpa [#allocation4], 1
    %2523 = vsyncpa [#allocation5], 1

</llo_original>
